<compile_context>
chip_gen: v7x
topology: tpu7x:2x2x1
jax: 0.10.0
libtpu: 0.0.40
codegen_flags: <defaults>
</compile_context>

<pallas_src>
import functools
import math

import numpy as np
import jax
import jax.numpy as jnp
from jax.experimental import pallas as pl
from jax.experimental.pallas import tpu as pltpu

_VMEM_LIMIT = 48 * 1024 * 1024   # <= v7x 64 MiB physical VMEM; fine on v5e/v6e


def _round_up(x, m):
    return ((x + m - 1) // m) * m


# ----------------------------------------------------------------------------
# Pallas kernel 1:  O(P, M) = act(W(P, K) @ A(K, M) + b(P, 1))
# Lane-dense: M (= N*OH*OW) is the last/lane dim of the output.
# Tiled over (M, K) with an f32 VMEM accumulator, pl.when init/finalize.
# ----------------------------------------------------------------------------
def _mm_bias_act_kernel(w_ref, a_ref, b_ref, o_ref, acc_ref, *, activation):
    @pl.when(pl.program_id(1) == 0)
    def _init():
        acc_ref[...] = jnp.zeros_like(acc_ref)

    acc_ref[...] += jnp.dot(w_ref[...], a_ref[...],
                            preferred_element_type=jnp.float32)

    @pl.when(pl.program_id(1) == pl.num_programs(1) - 1)
    def _finalize():
        # minimal f32 epilogue (v5e: single store slot, no bf16 VPU)
        r = acc_ref[...] + b_ref[...]                  # (P, tm) + (P, 1)
        if activation == "relu":
            r = jnp.maximum(r, 0.0)
        o_ref[...] = r.astype(o_ref.dtype)


def matmul_bias_act_t(w, a, b, activation="none", out_dtype=jnp.float32):
    """w (P,K) @ a (K,M) + b (P,) -> act(...) as (P, M) in out_dtype.

    MXU operands bf16; accumulation/bias/ReLU stay f32; store in out_dtype.
    """
    P, K = w.shape
    K2, M = a.shape
    assert K == K2
    w = w.astype(jnp.bfloat16)
    a = a.astype(jnp.bfloat16)
    b_col = b.reshape(P, 1).astype(jnp.float32)

    # K: pad to a multiple of 16 (bf16 sublane packing) and tile at 512 so the
    # reduction always pipelines and a huge un-tiled K block can never blow
    # v7x's 64 MiB VMEM.  Zero padding contributes nothing to the sum.
    Kp = _round_up(K, 16)
    tk = 512 if Kp > 512 else Kp
    Kp = _round_up(Kp, tk)
    if Kp != K:
        w = jnp.pad(w, ((0, 0), (0, Kp - K)))
        a = jnp.pad(a, ((0, Kp - K), (0, 0)))
    grid_k = Kp // tk

    # M: lane tile (multiple of 128), capped at 1024; guarantee >= 2 blocks
    # once M >= 256 so v7x's dual TensorCores both get "parallel" work.
    if M >= 256:
        tm = min(1024, _round_up(pl.cdiv(M, 2), 128))
    else:
        tm = M
    grid_m = pl.cdiv(M, tm)

    kern = functools.partial(_mm_bias_act_kernel, activation=activation)
    return pl.pallas_call(
        kern,
        grid=(grid_m, grid_k),
        in_specs=[
            pl.BlockSpec((P, tk), lambda m, k: (0, k)),
            pl.BlockSpec((tk, tm), lambda m, k: (k, m)),
            pl.BlockSpec((P, 1), lambda m, k: (0, 0)),
        ],
        out_specs=pl.BlockSpec((P, tm), lambda m, k: (0, m)),
        out_shape=jax.ShapeDtypeStruct((P, M), out_dtype),
        scratch_shapes=[pltpu.VMEM((P, tm), jnp.float32)],
        compiler_params=pltpu.CompilerParams(
            dimension_semantics=("parallel", "arbitrary"),
            vmem_limit_bytes=_VMEM_LIMIT),
    )(w, a, b_col)


# ----------------------------------------------------------------------------
# Pallas kernel 2: fused DUAL cluster head (grid=(2,), one step per head)
#   softmax(relu(z @ W1 + b1) @ W2 + b2), lane-dense (128-padded) softmax,
#   exact normalization.
# ----------------------------------------------------------------------------
def _dual_head_kernel(z_ref, w1_ref, b1_ref, w2_ref, b2_ref, o_ref):
    h = jnp.dot(z_ref[...], w1_ref[...], preferred_element_type=jnp.float32)
    h = jnp.maximum(h + b1_ref[...], 0.0)
    logits = jnp.dot(h.astype(jnp.bfloat16), w2_ref[...],
                     preferred_element_type=jnp.float32) + b2_ref[...]
    m = jnp.max(logits, axis=-1, keepdims=True)
    e = jnp.exp(logits - m)
    # exact division: downstream cluster losses may assume rows sum to 1
    o_ref[...] = (e / jnp.sum(e, axis=-1, keepdims=True)).astype(o_ref.dtype)


def dual_cluster_head(cl_stack, z_flat, num_cluster):
    two_n, D = z_flat.shape
    n = two_n // 2
    Hd = cl_stack["w1"].shape[2]
    Cp = cl_stack["w2"].shape[2]
    z3 = z_flat.reshape(2, n, D).astype(jnp.bfloat16)   # row 0 = zi, row 1 = zj
    out = pl.pallas_call(
        _dual_head_kernel,
        grid=(2,),
        in_specs=[
            pl.BlockSpec((None, n, D), lambda i: (i, 0, 0)),
            pl.BlockSpec((None, D, Hd), lambda i: (i, 0, 0)),
            pl.BlockSpec((None, 1, Hd), lambda i: (i, 0, 0)),
            pl.BlockSpec((None, Hd, Cp), lambda i: (i, 0, 0)),
            pl.BlockSpec((None, 1, Cp), lambda i: (i, 0, 0)),
        ],
        out_specs=pl.BlockSpec((None, n, Cp), lambda i: (i, 0, 0)),
        out_shape=jax.ShapeDtypeStruct((2, n, Cp), jnp.float32),
        compiler_params=pltpu.CompilerParams(
            dimension_semantics=("parallel",),
            vmem_limit_bytes=_VMEM_LIMIT),
    )(z3, cl_stack["w1"], cl_stack["b1"], cl_stack["w2"], cl_stack["b2"])
    return out[0, :, :num_cluster], out[1, :, :num_cluster]


# ----------------------------------------------------------------------------
# Plain-JAX glue: padding / im2col in C-major layout (fused by XLA under jit)
# ----------------------------------------------------------------------------
def _tf_same_pad_hw(x, k, s):
    """TensorFlow 'SAME' padding on the last two (H, W) dims of a 4D array."""
    H, W = x.shape[2], x.shape[3]
    out_h = math.ceil(H / s)
    out_w = math.ceil(W / s)
    pad_h = max((out_h - 1) * s + k - H, 0)
    pad_w = max((out_w - 1) * s + k - W, 0)
    return jnp.pad(x, ((0, 0), (0, 0),
                       (pad_h // 2, pad_h - pad_h // 2),
                       (pad_w // 2, pad_w - pad_w // 2)))


def _im2col_cm(x, kh, kw, sh, sw):
    """x (C,N,H,W) -> patches (C*kh*kw, N*OH*OW); rows ordered (C, dh, dw),
    columns ordered (N, oh, ow) row-major (lane-dense spatial axis)."""
    C, N, H, W = x.shape
    OH = (H - kh) // sh + 1
    OW = (W - kw) // sw + 1
    cols = []
    for di in range(kh):
        for dj in range(kw):
            cols.append(x[:, :, di:di + sh * (OH - 1) + 1:sh,
                             dj:dj + sw * (OW - 1) + 1:sw])      # (C, N, OH, OW)
    p = jnp.stack(cols, axis=0)                                  # (kh*kw, C, N, OH, OW)
    p = p.transpose(1, 0, 2, 3, 4)                               # (C, kh*kw, N, OH, OW)
    return p.reshape(C * kh * kw, N * OH * OW), OH, OW
# TODO(synk): fold this im2col into the Pallas kernel (manual make_async_copy
# of a padded C-major halo tile + k*k shifted in-kernel dots) once channel
# counts / image sizes grow; at these micro shapes the bf16 patch matrix is a
# few KiB so launch overhead, not HBM traffic, dominates.


def conv2d_same_relu_cm(x_cm, w_mat, bias, k, out_dtype):
    """Conv2dSamePad(k, 2) + Conv2d(stride=2) + ReLU.  C-major in/out."""
    s = 2
    cout = w_mat.shape[0]
    N = x_cm.shape[1]
    xp = _tf_same_pad_hw(x_cm.astype(jnp.bfloat16), k, s)
    patches, OH, OW = _im2col_cm(xp, k, k, s, s)                 # (Cin*k*k, N*OH*OW)
    out = matmul_bias_act_t(w_mat, patches, bias, "relu", out_dtype)
    return out.reshape(cout, N, OH, OW)                          # C-major, no transpose


def _deconv_phase_geometry(k, s=2):
    """Shared (over all phases) pad-lo / pad-hi / window size for the stride-s
    transposed conv in sub-pixel (phase) decomposition."""
    off = (k - s) // 2          # TF-style crop: floor(pad/2) rows/cols at top/left
    d_max, d_min = [], []
    for ph in range(s):
        c = ph + off
        ds = [(kk - c) // 2 for kk in range(k) if (kk - c) % 2 == 0]
        d_max.append(max(ds))
        d_min.append(min(ds))
    p_lo = max(d_max)
    p_hi = max(-d for d in d_min)
    return p_lo, p_hi, p_lo + p_hi + 1


def conv_transpose2d_same_relu_cm(x_cm, wm, bias_tiled, k, out_dtype):
    """ConvTranspose2d(stride=2) + ConvTranspose2dSamePad(k, 2) + ReLU, C-major.

    All s*s output phases are produced by ONE matmul kernel call: the merged
    weight `wm` (built at init) stacks the per-phase taps along the output-row
    axis (unused taps zero), so a single shared patch matrix from one
    maximally padded input serves every phase; a pixel-shuffle interleave then
    assembles the (Cout, N, 2H, 2W) output.  The SamePad crop (pad = k-stride,
    TF-style floor(pad/2) at top/left) is folded into the phase offsets.
    """
    s = 2
    P = wm.shape[0]
    cout = P // (s * s)
    C, N, H, W = x_cm.shape
    p_lo, p_hi, T = _deconv_phase_geometry(k, s)
    xp = jnp.pad(x_cm.astype(jnp.bfloat16),
                 ((0, 0), (0, 0), (p_lo, p_hi), (p_lo, p_hi)))
    patches, _, _ = _im2col_cm(xp, T, T, 1, 1)                   # (Cin*T*T, N*H*W)
    out = matmul_bias_act_t(wm, patches, bias_tiled, "relu", out_dtype)
    y = out.reshape(s, s, cout, N, H, W).transpose(2, 3, 4, 0, 5, 1)
    return y.reshape(cout, N, s * H, s * W)                      # (Cout, N, 2H, 2W)


# ----------------------------------------------------------------------------
# Weight packing (done once at init, not inside the jitted forward)
# ----------------------------------------------------------------------------
def _pack_conv_weight(w):
    return w.reshape(w.shape[0], -1).astype(jnp.bfloat16)        # (Cout, Cin*k*k)


def _pack_deconv_weight(w, k, s=2):
    """PyTorch ConvTranspose2d weight (Cin, Cout, k, k) -> merged phase weight
    (s*s*Cout, Cin*T*T), rows ordered (ph, pw, cout), cols (cin, th, tw)."""
    cin, cout = w.shape[0], w.shape[1]
    off = (k - s) // 2
    p_lo, _, T = _deconv_phase_geometry(k, s)
    wn = np.asarray(jax.device_get(w), dtype=np.float32)
    wm = np.zeros((s, s, cout, cin, T, T), dtype=np.float32)
    for ph in range(s):
        ch = ph + off
        for pw in range(s):
            cw = pw + off
            for th in range(T):
                kh = ch + 2 * (p_lo - th)
                if not 0 <= kh < k:
                    continue
                for tw in range(T):
                    kw_ = cw + 2 * (p_lo - tw)
                    if not 0 <= kw_ < k:
                        continue
                    wm[ph, pw, :, :, th, tw] = wn[:, :, kh, kw_].T   # (Cout, Cin)
    return jnp.asarray(wm.reshape(s * s * cout, cin * T * T), dtype=jnp.bfloat16)


def _pack_head_stack(cl1, cl2):
    """Stack both cluster heads for the fused dual-head kernel; pad num_cluster
    to 128 lanes (zero weights, -1e9 bias) so the softmax/store is lane-dense."""
    hd, _ = cl1["w1"].shape
    c = cl1["w2"].shape[0]
    cp = _round_up(c, 128)

    def one(p):
        w1 = p["w1"].T.astype(jnp.bfloat16)                              # (D, Hd)
        b1 = p["b1"].reshape(1, hd).astype(jnp.float32)
        w2 = jnp.zeros((hd, cp), jnp.float32).at[:, :c].set(p["w2"].T)
        b2 = jnp.full((1, cp), -1e9, jnp.float32).at[:, :c].set(p["b2"])
        return w1, b1, w2.astype(jnp.bfloat16), b2

    p1, p2 = one(cl1), one(cl2)
    return {"w1": jnp.stack([p1[0], p2[0]]), "b1": jnp.stack([p1[1], p2[1]]),
            "w2": jnp.stack([p1[2], p2[2]]), "b2": jnp.stack([p1[3], p2[3]])}


# ----------------------------------------------------------------------------
# Parameters (deterministic, synthetic) and DSCNet forward
# ----------------------------------------------------------------------------
def init_params(key, channels, kernels, rep_dim, num_cluster):
    def nrm(key, shape, scale=0.1):
        return scale * jax.random.normal(key, shape, dtype=jnp.float32)

    params = {"enc": [], "dec": [], "cl1": {}, "cl2": {}}
    keys = iter(jax.random.split(key, 64))

    # ae1 encoder: Conv2d(c[i-1], c[i], kernels[i-1], stride=2)
    for i in range(1, len(channels)):
        cin, cout, k = channels[i - 1], channels[i], kernels[i - 1]
        w = nrm(next(keys), (cout, cin, k, k))
        params["enc"].append({"w": w, "b": nrm(next(keys), (cout,)),
                              "w_mat": _pack_conv_weight(w)})

    # ae1 decoder: ConvTranspose2d(rc[i], rc[i+1], rkernels[i], stride=2)
    rch = list(reversed(channels))
    rks = list(reversed(kernels))
    for i in range(len(rch) - 1):
        cin, cout, k = rch[i], rch[i + 1], rks[i]
        w = nrm(next(keys), (cin, cout, k, k))           # torch ConvTranspose2d layout
        b = nrm(next(keys), (cout,))
        params["dec"].append({"w": w, "b": b,
                              "wm": _pack_deconv_weight(w, k),
                              "b_tiled": jnp.tile(b, 4)})        # 4 = stride*stride

    # cl1 / cl2: Linear(rep_dim, 256) -> ReLU -> Linear(256, num_cluster) -> Softmax
    for name in ("cl1", "cl2"):
        params[name] = {"w1": nrm(next(keys), (256, rep_dim)),   # torch (out, in)
                        "b1": nrm(next(keys), (256,)),
                        "w2": nrm(next(keys), (num_cluster, 256)),
                        "b2": nrm(next(keys), (num_cluster,))}
    params["cl_stack"] = _pack_head_stack(params["cl1"], params["cl2"])
    # TODO(synk): ae2 parameters are unused in DSCNet.forward, so not materialized.
    return params


def encoder_cm(params, x_cm, enc_ks):
    last = len(params["enc"]) - 1
    for idx, (layer, k) in enumerate(zip(params["enc"], enc_ks)):
        dt = jnp.float32 if idx == last else jnp.bfloat16        # bf16 intermediates
        x_cm = conv2d_same_relu_cm(x_cm, layer["w_mat"], layer["b"], k, dt)
    return x_cm


def decoder_cm(params, h_cm, dec_ks):
    last = len(params["dec"]) - 1
    for idx, (layer, k) in enumerate(zip(params["dec"], dec_ks)):
        dt = jnp.float32 if idx == last else jnp.bfloat16
        h_cm = conv_transpose2d_same_relu_cm(h_cm, layer["wm"], layer["b_tiled"], k, dt)
    return h_cm


def dscnet_forward(params, xi, xj, enc_ks, dec_ks):
    n = xi.shape[0]
    num_cluster = params["cl1"]["w2"].shape[0]
    x = jnp.concatenate([xi, xj], axis=0)          # shared ae1 weights -> one pass
    x_cm = x.transpose(1, 0, 2, 3)                 # NCHW -> C-major (C, N, H, W)
    z_cm = encoder_cm(params, x_cm, enc_ks)        # (C, 2n, h, w), f32
    recon_cm = decoder_cm(params, z_cm, dec_ks)    # (Cin, 2n, H, W), f32
    recon = recon_cm.transpose(1, 0, 2, 3)         # back to NCHW once, at the end
    xi_recon, xj_recon = recon[:n], recon[n:]
    z_flat = z_cm.transpose(1, 0, 2, 3).reshape(2 * n, -1)   # torch .view(n, -1) order
    zi_flat, zj_flat = z_flat[:n], z_flat[n:]
    ci, cj = dual_cluster_head(params["cl_stack"], z_flat, num_cluster)
    return xi_recon, xj_recon, zi_flat, zj_flat, ci, cj
    # TODO(synk): ClusterLoss lives in loss_fn, not forward; not implemented here.


# ----------------------------------------------------------------------------
# Plain-JAX (lax) reference — correctness check only. Conv / head operands are
# cast to bf16 exactly like the Pallas path, so mismatches indicate structural
# bugs (crop side / phase interleave / layout), not precision.
# ----------------------------------------------------------------------------
def _reference_forward(params, xi, xj, enc_ks, dec_ks):
    def conv(x, w, b, k):
        xp = _tf_same_pad_hw(x, k, 2).astype(jnp.bfloat16)
        y = jax.lax.conv_general_dilated(
            xp, w.astype(jnp.bfloat16), window_strides=(2, 2), padding="VALID",
            dimension_numbers=("NCHW", "OIHW", "NCHW"),
            preferred_element_type=jnp.float32)
        return jnp.maximum(y + b[None, :, None, None], 0.0)

    def convT(x, w, b, k):
        wc = jnp.flip(w, axis=(2, 3)).transpose(1, 0, 2, 3)      # (Cout, Cin, k, k)
        y = jax.lax.conv_general_dilated(
            x.astype(jnp.bfloat16), wc.astype(jnp.bfloat16),
            window_strides=(1, 1), padding=[(k - 1, k - 1), (k - 1, k - 1)],
            lhs_dilation=(2, 2), dimension_numbers=("NCHW", "OIHW", "NCHW"),
            preferred_element_type=jnp.float32)
        y = y + b[None, :, None, None]
        pad = k - 2
        pt, pleft = pad // 2, pad // 2
        Ho, Wo = y.shape[2], y.shape[3]
        return jnp.maximum(y[:, :, pt:Ho - (pad - pt), pleft:Wo - (pad - pleft)], 0.0)

    def enc(x):
        for layer, k in zip(params["enc"], enc_ks):
            x = conv(x, layer["w"], layer["b"], k)
        return x

    def dec(x):
        for layer, k in zip(params["dec"], dec_ks):
            x = convT(x, layer["w"], layer["b"], k)
        return x

    def head(p, z):
        h = jnp.dot(z.astype(jnp.bfloat16), p["w1"].T.astype(jnp.bfloat16),
                    preferred_element_type=jnp.float32) + p["b1"]
        h = jnp.maximum(h, 0.0)
        logits = jnp.dot(h.astype(jnp.bfloat16), p["w2"].T.astype(jnp.bfloat16),
                         preferred_element_type=jnp.float32) + p["b2"]
        return jax.nn.softmax(logits, axis=-1)

    zi, zj = enc(xi), enc(xj)
    zi_f = zi.reshape(xi.shape[0], -1)
    zj_f = zj.reshape(xj.shape[0], -1)
    return (dec(zi), dec(zj), zi_f, zj_f,
            head(params["cl1"], zi_f), head(params["cl2"], zj_f))


# ----------------------------------------------------------------------------
# Main
# ----------------------------------------------------------------------------
if __name__ == "__main__":
    channels = [1, 4, 8]        # input channel 1, two encoder conv layers
    kernels = (3, 3)
    num_sample = 2              # batch size n (per view)
    H = W = 16
    rep_dim = channels[-1] * (H // 4) * (W // 4)    # 16 -> 8 -> 4 spatial => 128
    num_cluster = 4

    key = jax.random.PRNGKey(0)
    kp, kxi, kxj = jax.random.split(key, 3)
    params = init_params(kp, channels, kernels, rep_dim, num_cluster)

    xi = jax.random.normal(kxi, (num_sample, channels[0], H, W), dtype=jnp.float32)
    xj = jax.random.normal(kxj, (num_sample, channels[0], H, W), dtype=jnp.float32)

    enc_ks = tuple(kernels)
    dec_ks = tuple(reversed(kernels))

    fwd = jax.jit(dscnet_forward, static_argnames=("enc_ks", "dec_ks"))
    outs = fwd(params, xi, xj, enc_ks=enc_ks, dec_ks=dec_ks)
    outs = jax.block_until_ready(outs)
    xi_recon, xj_recon, zi, zj, ci, cj = outs

    assert xi_recon.shape == (num_sample, channels[0], H, W)
    assert xj_recon.shape == (num_sample, channels[0], H, W)
    assert zi.shape == (num_sample, rep_dim)
    assert zj.shape == (num_sample, rep_dim)
    assert ci.shape == (num_sample, num_cluster)
    assert cj.shape == (num_sample, num_cluster)
    # exact softmax normalization (padded lanes contribute exactly 0)
    assert jnp.allclose(jnp.sum(ci, axis=1), 1.0, atol=1e-4)
    assert jnp.allclose(jnp.sum(cj, axis=1), 1.0, atol=1e-4)

    # Numeric check vs plain-JAX lax reference: validates the
    # ConvTranspose2dSamePad crop side, the merged-phase interleave and the
    # C-major layout plumbing.  Tolerances allow for bf16 rounding of the
    # intermediate activations (structural bugs would be O(0.1-1)).
    refs = _reference_forward(params, xi, xj, enc_ks, dec_ks)
    names = ("xi_recon", "xj_recon", "zi", "zj", "ci", "cj")
    for name, got, want in zip(names, outs, refs):
        err = float(jnp.max(jnp.abs(got - want)))
        assert err < 2e-2, f"{name} mismatch vs reference: max|diff|={err}"

    print("KERNEL_OK")
</pallas_src>

<mosaic_0001>
module attributes {stable_mosaic.version = 11 : i64} {
  func.func @_mm_bias_act_kernel(%arg0: i32, %arg1: i32, %arg2: memref<4x16xbf16, #tpu.memory_space<vmem>>, %arg3: memref<16x128xbf16, #tpu.memory_space<vmem>>, %arg4: memref<4x1xf32, #tpu.memory_space<vmem>>, %arg5: memref<4x128xbf16, #tpu.memory_space<vmem>>, %arg6: memref<4x128xf32, #tpu.memory_space<vmem>>) attributes {dimension_semantics = [#tpu.dimension_semantics<parallel>, #tpu.dimension_semantics<arbitrary>], iteration_bounds = array<i64: 2, 1>, scalar_prefetch = 0 : i64, scratch_operands = 1 : i64, tpu.core_type = #tpu.core_type<tc>, window_params = [{transform_indices = @transform_0, window_bounds = array<i64: 4, 16>}, {transform_indices = @transform_1, window_bounds = array<i64: 16, 128>}, {pipeline_mode = #tpu.pipeline_mode<synchronous>, transform_indices = @transform_2, window_bounds = array<i64: 4, 1>}, {transform_indices = @transform_3, window_bounds = array<i64: 4, 128>}]} {
    %c0_i32 = arith.constant 0 : i32
    %0 = arith.cmpi eq, %arg1, %c0_i32 : i32
    %1 = arith.extui %0 : i1 to i32
    %c0_i32_0 = arith.constant 0 : i32
    %2 = arith.cmpi ne, %1, %c0_i32_0 : i32
    scf.if %2 {
      %cst_10 = arith.constant 0.000000e+00 : f32
      %12 = vector.broadcast %cst_10 : f32 to vector<4x128xf32>
      %c0_11 = arith.constant 0 : index
      %c0_12 = arith.constant 0 : index
      %13 = vector.load %arg6[%c0_11, %c0_12] : memref<4x128xf32, #tpu.memory_space<vmem>>, vector<4x128xf32>
      tpu.vector_store %arg6[%c0_11, %c0_12], %12 {strides = array<i32>} : memref<4x128xf32, #tpu.memory_space<vmem>>, vector<4x128xf32>,
    } else {
    }
    %c0 = arith.constant 0 : index
    %c0_1 = arith.constant 0 : index
    %3 = vector.load %arg6[%c0, %c0_1] : memref<4x128xf32, #tpu.memory_space<vmem>>, vector<4x128xf32>
    %c0_2 = arith.constant 0 : index
    %c0_3 = arith.constant 0 : index
    %4 = vector.load %arg2[%c0_2, %c0_3] : memref<4x16xbf16, #tpu.memory_space<vmem>>, vector<4x16xbf16>
    %c0_4 = arith.constant 0 : index
    %c0_5 = arith.constant 0 : index
    %5 = vector.load %arg3[%c0_4, %c0_5] : memref<16x128xbf16, #tpu.memory_space<vmem>>, vector<16x128xbf16>
    %cst = arith.constant dense<0.000000e+00> : vector<4x128xf32>
    %6 = tpu.matmul %4, %5, %cst {dimension_numbers = #tpu.dot_dimension_numbers<[1], [0], [0], [1], [0, 0, 1, 1], [], []>} : vector<4x16xbf16>, vector<16x128xbf16>, vector<4x128xf32> -> vector<4x128xf32>
    %7 = arith.addf %3, %6 : vector<4x128xf32>
    %c0_6 = arith.constant 0 : index
    %c0_7 = arith.constant 0 : index
    %8 = vector.load %arg6[%c0_6, %c0_7] : memref<4x128xf32, #tpu.memory_space<vmem>>, vector<4x128xf32>
    tpu.vector_store %arg6[%c0_6, %c0_7], %7 {strides = array<i32>} : memref<4x128xf32, #tpu.memory_space<vmem>>, vector<4x128xf32>,
    %c0_i32_8 = arith.constant 0 : i32
    %9 = arith.cmpi eq, %arg1, %c0_i32_8 : i32
    %10 = arith.extui %9 : i1 to i32
    %c0_i32_9 = arith.constant 0 : i32
    %11 = arith.cmpi ne, %10, %c0_i32_9 : i32
    scf.if %11 {
      %c0_10 = arith.constant 0 : index
      %c0_11 = arith.constant 0 : index
      %12 = vector.load %arg6[%c0_10, %c0_11] : memref<4x128xf32, #tpu.memory_space<vmem>>, vector<4x128xf32>
      %c0_12 = arith.constant 0 : index
      %c0_13 = arith.constant 0 : index
      %13 = vector.load %arg4[%c0_12, %c0_13] : memref<4x1xf32, #tpu.memory_space<vmem>>, vector<4x1xf32>
      %14 = vector.broadcast %13 : vector<4x1xf32> to vector<4x128xf32>
      %15 = arith.addf %12, %14 : vector<4x128xf32>
      %cst_14 = arith.constant 0.000000e+00 : f32
      %16 = vector.broadcast %cst_14 : f32 to vector<4x128xf32>
      %17 = arith.maximumf %15, %16 : vector<4x128xf32>
      %18 = arith.truncf %17 : vector<4x128xf32> to vector<4x128xbf16>
      %c0_15 = arith.constant 0 : index
      %c0_16 = arith.constant 0 : index
      %19 = vector.load %arg5[%c0_15, %c0_16] : memref<4x128xbf16, #tpu.memory_space<vmem>>, vector<4x128xbf16>
      tpu.vector_store %arg5[%c0_15, %c0_16], %18 {strides = array<i32>} : memref<4x128xbf16, #tpu.memory_space<vmem>>, vector<4x128xbf16>,
    } else {
    }
    return
  }
  func.func @transform_0(%arg0: i32, %arg1: i32) -> (i32, i32) {
    %c0_i32 = arith.constant 0 : i32
    %c0_i32_0 = arith.constant 0 : i32
    return %c0_i32, %arg1 : i32, i32
  }
  func.func @transform_1(%arg0: i32, %arg1: i32) -> (i32, i32) {
    %c0_i32 = arith.constant 0 : i32
    return %arg1, %arg0 : i32, i32
  }
  func.func @transform_2(%arg0: i32, %arg1: i32) -> (i32, i32) {
    %c0_i32 = arith.constant 0 : i32
    %c0_i32_0 = arith.constant 0 : i32
    %c0_i32_1 = arith.constant 0 : i32
    return %c0_i32, %c0_i32_0 : i32, i32
  }
  func.func @transform_3(%arg0: i32, %arg1: i32) -> (i32, i32) {
    %c0_i32 = arith.constant 0 : i32
    %c0_i32_0 = arith.constant 0 : i32
    return %c0_i32, %arg0 : i32, i32
  }
}

module attributes {stable_mosaic.version = 11 : i64} {
  func.func @_mm_bias_act_kernel(%arg0: i32, %arg1: i32, %arg2: memref<8x48xbf16, #tpu.memory_space<vmem>>, %arg3: memref<48x64xbf16, #tpu.memory_space<vmem>>, %arg4: memref<8x1xf32, #tpu.memory_space<vmem>>, %arg5: memref<8x64xf32, #tpu.memory_space<vmem>>, %arg6: memref<8x64xf32, #tpu.memory_space<vmem>>) attributes {dimension_semantics = [#tpu.dimension_semantics<parallel>, #tpu.dimension_semantics<arbitrary>], iteration_bounds = array<i64: 1, 1>, scalar_prefetch = 0 : i64, scratch_operands = 1 : i64, tpu.core_type = #tpu.core_type<tc>, window_params = [{transform_indices = @transform_0, window_bounds = array<i64: 8, 48>}, {transform_indices = @transform_1, window_bounds = array<i64: 48, 64>}, {pipeline_mode = #tpu.pipeline_mode<synchronous>, transform_indices = @transform_2, window_bounds = array<i64: 8, 1>}, {transform_indices = @transform_3, window_bounds = array<i64: 8, 64>}]} {
    %c0_i32 = arith.constant 0 : i32
    %0 = arith.cmpi eq, %arg1, %c0_i32 : i32
    %1 = arith.extui %0 : i1 to i32
    %c0_i32_0 = arith.constant 0 : i32
    %2 = arith.cmpi ne, %1, %c0_i32_0 : i32
    scf.if %2 {
      %cst_10 = arith.constant 0.000000e+00 : f32
      %12 = vector.broadcast %cst_10 : f32 to vector<8x64xf32>
      %c0_11 = arith.constant 0 : index
      %c0_12 = arith.constant 0 : index
      %13 = vector.load %arg6[%c0_11, %c0_12] : memref<8x64xf32, #tpu.memory_space<vmem>>, vector<8x64xf32>
      tpu.vector_store %arg6[%c0_11, %c0_12], %12 {strides = array<i32>} : memref<8x64xf32, #tpu.memory_space<vmem>>, vector<8x64xf32>,
    } else {
    }
    %c0 = arith.constant 0 : index
    %c0_1 = arith.constant 0 : index
    %3 = vector.load %arg6[%c0, %c0_1] : memref<8x64xf32, #tpu.memory_space<vmem>>, vector<8x64xf32>
    %c0_2 = arith.constant 0 : index
    %c0_3 = arith.constant 0 : index
    %4 = vector.load %arg2[%c0_2, %c0_3] : memref<8x48xbf16, #tpu.memory_space<vmem>>, vector<8x48xbf16>
    %c0_4 = arith.constant 0 : index
    %c0_5 = arith.constant 0 : index
    %5 = vector.load %arg3[%c0_4, %c0_5] : memref<48x64xbf16, #tpu.memory_space<vmem>>, vector<48x64xbf16>
    %cst = arith.constant dense<0.000000e+00> : vector<8x64xf32>
    %6 = tpu.matmul %4, %5, %cst {dimension_numbers = #tpu.dot_dimension_numbers<[1], [0], [0], [1], [0, 0, 1, 1], [], []>} : vector<8x48xbf16>, vector<48x64xbf16>, vector<8x64xf32> -> vector<8x64xf32>
    %7 = arith.addf %3, %6 : vector<8x64xf32>
    %c0_6 = arith.constant 0 : index
    %c0_7 = arith.constant 0 : index
    %8 = vector.load %arg6[%c0_6, %c0_7] : memref<8x64xf32, #tpu.memory_space<vmem>>, vector<8x64xf32>
    tpu.vector_store %arg6[%c0_6, %c0_7], %7 {strides = array<i32>} : memref<8x64xf32, #tpu.memory_space<vmem>>, vector<8x64xf32>,
    %c0_i32_8 = arith.constant 0 : i32
    %9 = arith.cmpi eq, %arg1, %c0_i32_8 : i32
    %10 = arith.extui %9 : i1 to i32
    %c0_i32_9 = arith.constant 0 : i32
    %11 = arith.cmpi ne, %10, %c0_i32_9 : i32
    scf.if %11 {
      %c0_10 = arith.constant 0 : index
      %c0_11 = arith.constant 0 : index
      %12 = vector.load %arg6[%c0_10, %c0_11] : memref<8x64xf32, #tpu.memory_space<vmem>>, vector<8x64xf32>
      %c0_12 = arith.constant 0 : index
      %c0_13 = arith.constant 0 : index
      %13 = vector.load %arg4[%c0_12, %c0_13] : memref<8x1xf32, #tpu.memory_space<vmem>>, vector<8x1xf32>
      %14 = vector.broadcast %13 : vector<8x1xf32> to vector<8x64xf32>
      %15 = arith.addf %12, %14 : vector<8x64xf32>
      %cst_14 = arith.constant 0.000000e+00 : f32
      %16 = vector.broadcast %cst_14 : f32 to vector<8x64xf32>
      %17 = arith.maximumf %15, %16 : vector<8x64xf32>
      %c0_15 = arith.constant 0 : index
      %c0_16 = arith.constant 0 : index
      %18 = vector.load %arg5[%c0_15, %c0_16] : memref<8x64xf32, #tpu.memory_space<vmem>>, vector<8x64xf32>
      tpu.vector_store %arg5[%c0_15, %c0_16], %17 {strides = array<i32>} : memref<8x64xf32, #tpu.memory_space<vmem>>, vector<8x64xf32>,
    } else {
    }
    return
  }
  func.func @transform_0(%arg0: i32, %arg1: i32) -> (i32, i32) {
    %c0_i32 = arith.constant 0 : i32
    %c0_i32_0 = arith.constant 0 : i32
    return %c0_i32, %arg1 : i32, i32
  }
  func.func @transform_1(%arg0: i32, %arg1: i32) -> (i32, i32) {
    %c0_i32 = arith.constant 0 : i32
    return %arg1, %arg0 : i32, i32
  }
  func.func @transform_2(%arg0: i32, %arg1: i32) -> (i32, i32) {
    %c0_i32 = arith.constant 0 : i32
    %c0_i32_0 = arith.constant 0 : i32
    %c0_i32_1 = arith.constant 0 : i32
    return %c0_i32, %c0_i32_0 : i32, i32
  }
  func.func @transform_3(%arg0: i32, %arg1: i32) -> (i32, i32) {
    %c0_i32 = arith.constant 0 : i32
    %c0_i32_0 = arith.constant 0 : i32
    return %c0_i32, %arg0 : i32, i32
  }
}

module attributes {stable_mosaic.version = 11 : i64} {
  func.func @_mm_bias_act_kernel(%arg0: i32, %arg1: i32, %arg2: memref<16x32xbf16, #tpu.memory_space<vmem>>, %arg3: memref<32x64xbf16, #tpu.memory_space<vmem>>, %arg4: memref<16x1xf32, #tpu.memory_space<vmem>>, %arg5: memref<16x64xbf16, #tpu.memory_space<vmem>>, %arg6: memref<16x64xf32, #tpu.memory_space<vmem>>) attributes {dimension_semantics = [#tpu.dimension_semantics<parallel>, #tpu.dimension_semantics<arbitrary>], iteration_bounds = array<i64: 1, 1>, scalar_prefetch = 0 : i64, scratch_operands = 1 : i64, tpu.core_type = #tpu.core_type<tc>, window_params = [{transform_indices = @transform_0, window_bounds = array<i64: 16, 32>}, {transform_indices = @transform_1, window_bounds = array<i64: 32, 64>}, {pipeline_mode = #tpu.pipeline_mode<synchronous>, transform_indices = @transform_2, window_bounds = array<i64: 16, 1>}, {transform_indices = @transform_3, window_bounds = array<i64: 16, 64>}]} {
    %c0_i32 = arith.constant 0 : i32
    %0 = arith.cmpi eq, %arg1, %c0_i32 : i32
    %1 = arith.extui %0 : i1 to i32
    %c0_i32_0 = arith.constant 0 : i32
    %2 = arith.cmpi ne, %1, %c0_i32_0 : i32
    scf.if %2 {
      %cst_10 = arith.constant 0.000000e+00 : f32
      %12 = vector.broadcast %cst_10 : f32 to vector<16x64xf32>
      %c0_11 = arith.constant 0 : index
      %c0_12 = arith.constant 0 : index
      %13 = vector.load %arg6[%c0_11, %c0_12] : memref<16x64xf32, #tpu.memory_space<vmem>>, vector<16x64xf32>
      tpu.vector_store %arg6[%c0_11, %c0_12], %12 {strides = array<i32>} : memref<16x64xf32, #tpu.memory_space<vmem>>, vector<16x64xf32>,
    } else {
    }
    %c0 = arith.constant 0 : index
    %c0_1 = arith.constant 0 : index
    %3 = vector.load %arg6[%c0, %c0_1] : memref<16x64xf32, #tpu.memory_space<vmem>>, vector<16x64xf32>
    %c0_2 = arith.constant 0 : index
    %c0_3 = arith.constant 0 : index
    %4 = vector.load %arg2[%c0_2, %c0_3] : memref<16x32xbf16, #tpu.memory_space<vmem>>, vector<16x32xbf16>
    %c0_4 = arith.constant 0 : index
    %c0_5 = arith.constant 0 : index
    %5 = vector.load %arg3[%c0_4, %c0_5] : memref<32x64xbf16, #tpu.memory_space<vmem>>, vector<32x64xbf16>
    %cst = arith.constant dense<0.000000e+00> : vector<16x64xf32>
    %6 = tpu.matmul %4, %5, %cst {dimension_numbers = #tpu.dot_dimension_numbers<[1], [0], [0], [1], [0, 0, 1, 1], [], []>} : vector<16x32xbf16>, vector<32x64xbf16>, vector<16x64xf32> -> vector<16x64xf32>
    %7 = arith.addf %3, %6 : vector<16x64xf32>
    %c0_6 = arith.constant 0 : index
    %c0_7 = arith.constant 0 : index
    %8 = vector.load %arg6[%c0_6, %c0_7] : memref<16x64xf32, #tpu.memory_space<vmem>>, vector<16x64xf32>
    tpu.vector_store %arg6[%c0_6, %c0_7], %7 {strides = array<i32>} : memref<16x64xf32, #tpu.memory_space<vmem>>, vector<16x64xf32>,
    %c0_i32_8 = arith.constant 0 : i32
    %9 = arith.cmpi eq, %arg1, %c0_i32_8 : i32
    %10 = arith.extui %9 : i1 to i32
    %c0_i32_9 = arith.constant 0 : i32
    %11 = arith.cmpi ne, %10, %c0_i32_9 : i32
    scf.if %11 {
      %c0_10 = arith.constant 0 : index
      %c0_11 = arith.constant 0 : index
      %12 = vector.load %arg6[%c0_10, %c0_11] : memref<16x64xf32, #tpu.memory_space<vmem>>, vector<16x64xf32>
      %c0_12 = arith.constant 0 : index
      %c0_13 = arith.constant 0 : index
      %13 = vector.load %arg4[%c0_12, %c0_13] : memref<16x1xf32, #tpu.memory_space<vmem>>, vector<16x1xf32>
      %14 = vector.broadcast %13 : vector<16x1xf32> to vector<16x64xf32>
      %15 = arith.addf %12, %14 : vector<16x64xf32>
      %cst_14 = arith.constant 0.000000e+00 : f32
      %16 = vector.broadcast %cst_14 : f32 to vector<16x64xf32>
      %17 = arith.maximumf %15, %16 : vector<16x64xf32>
      %18 = arith.truncf %17 : vector<16x64xf32> to vector<16x64xbf16>
      %c0_15 = arith.constant 0 : index
      %c0_16 = arith.constant 0 : index
      %19 = vector.load %arg5[%c0_15, %c0_16] : memref<16x64xbf16, #tpu.memory_space<vmem>>, vector<16x64xbf16>
      tpu.vector_store %arg5[%c0_15, %c0_16], %18 {strides = array<i32>} : memref<16x64xbf16, #tpu.memory_space<vmem>>, vector<16x64xbf16>,
    } else {
    }
    return
  }
  func.func @transform_0(%arg0: i32, %arg1: i32) -> (i32, i32) {
    %c0_i32 = arith.constant 0 : i32
    %c0_i32_0 = arith.constant 0 : i32
    return %c0_i32, %arg1 : i32, i32
  }
  func.func @transform_1(%arg0: i32, %arg1: i32) -> (i32, i32) {
    %c0_i32 = arith.constant 0 : i32
    return %arg1, %arg0 : i32, i32
  }
  func.func @transform_2(%arg0: i32, %arg1: i32) -> (i32, i32) {
    %c0_i32 = arith.constant 0 : i32
    %c0_i32_0 = arith.constant 0 : i32
    %c0_i32_1 = arith.constant 0 : i32
    return %c0_i32, %c0_i32_0 : i32, i32
  }
  func.func @transform_3(%arg0: i32, %arg1: i32) -> (i32, i32) {
    %c0_i32 = arith.constant 0 : i32
    %c0_i32_0 = arith.constant 0 : i32
    return %c0_i32, %arg0 : i32, i32
  }
}

module attributes {stable_mosaic.version = 11 : i64} {
  func.func @_mm_bias_act_kernel(%arg0: i32, %arg1: i32, %arg2: memref<4x16xbf16, #tpu.memory_space<vmem>>, %arg3: memref<16x128xbf16, #tpu.memory_space<vmem>>, %arg4: memref<4x1xf32, #tpu.memory_space<vmem>>, %arg5: memref<4x128xf32, #tpu.memory_space<vmem>>, %arg6: memref<4x128xf32, #tpu.memory_space<vmem>>) attributes {dimension_semantics = [#tpu.dimension_semantics<parallel>, #tpu.dimension_semantics<arbitrary>], iteration_bounds = array<i64: 2, 1>, scalar_prefetch = 0 : i64, scratch_operands = 1 : i64, tpu.core_type = #tpu.core_type<tc>, window_params = [{transform_indices = @transform_0, window_bounds = array<i64: 4, 16>}, {transform_indices = @transform_1, window_bounds = array<i64: 16, 128>}, {pipeline_mode = #tpu.pipeline_mode<synchronous>, transform_indices = @transform_2, window_bounds = array<i64: 4, 1>}, {transform_indices = @transform_3, window_bounds = array<i64: 4, 128>}]} {
    %c0_i32 = arith.constant 0 : i32
    %0 = arith.cmpi eq, %arg1, %c0_i32 : i32
    %1 = arith.extui %0 : i1 to i32
    %c0_i32_0 = arith.constant 0 : i32
    %2 = arith.cmpi ne, %1, %c0_i32_0 : i32
    scf.if %2 {
      %cst_10 = arith.constant 0.000000e+00 : f32
      %12 = vector.broadcast %cst_10 : f32 to vector<4x128xf32>
      %c0_11 = arith.constant 0 : index
      %c0_12 = arith.constant 0 : index
      %13 = vector.load %arg6[%c0_11, %c0_12] : memref<4x128xf32, #tpu.memory_space<vmem>>, vector<4x128xf32>
      tpu.vector_store %arg6[%c0_11, %c0_12], %12 {strides = array<i32>} : memref<4x128xf32, #tpu.memory_space<vmem>>, vector<4x128xf32>,
    } else {
    }
    %c0 = arith.constant 0 : index
    %c0_1 = arith.constant 0 : index
    %3 = vector.load %arg6[%c0, %c0_1] : memref<4x128xf32, #tpu.memory_space<vmem>>, vector<4x128xf32>
    %c0_2 = arith.constant 0 : index
    %c0_3 = arith.constant 0 : index
    %4 = vector.load %arg2[%c0_2, %c0_3] : memref<4x16xbf16, #tpu.memory_space<vmem>>, vector<4x16xbf16>
    %c0_4 = arith.constant 0 : index
    %c0_5 = arith.constant 0 : index
    %5 = vector.load %arg3[%c0_4, %c0_5] : memref<16x128xbf16, #tpu.memory_space<vmem>>, vector<16x128xbf16>
    %cst = arith.constant dense<0.000000e+00> : vector<4x128xf32>
    %6 = tpu.matmul %4, %5, %cst {dimension_numbers = #tpu.dot_dimension_numbers<[1], [0], [0], [1], [0, 0, 1, 1], [], []>} : vector<4x16xbf16>, vector<16x128xbf16>, vector<4x128xf32> -> vector<4x128xf32>
    %7 = arith.addf %3, %6 : vector<4x128xf32>
    %c0_6 = arith.constant 0 : index
    %c0_7 = arith.constant 0 : index
    %8 = vector.load %arg6[%c0_6, %c0_7] : memref<4x128xf32, #tpu.memory_space<vmem>>, vector<4x128xf32>
    tpu.vector_store %arg6[%c0_6, %c0_7], %7 {strides = array<i32>} : memref<4x128xf32, #tpu.memory_space<vmem>>, vector<4x128xf32>,
    %c0_i32_8 = arith.constant 0 : i32
    %9 = arith.cmpi eq, %arg1, %c0_i32_8 : i32
    %10 = arith.extui %9 : i1 to i32
    %c0_i32_9 = arith.constant 0 : i32
    %11 = arith.cmpi ne, %10, %c0_i32_9 : i32
    scf.if %11 {
      %c0_10 = arith.constant 0 : index
      %c0_11 = arith.constant 0 : index
      %12 = vector.load %arg6[%c0_10, %c0_11] : memref<4x128xf32, #tpu.memory_space<vmem>>, vector<4x128xf32>
      %c0_12 = arith.constant 0 : index
      %c0_13 = arith.constant 0 : index
      %13 = vector.load %arg4[%c0_12, %c0_13] : memref<4x1xf32, #tpu.memory_space<vmem>>, vector<4x1xf32>
      %14 = vector.broadcast %13 : vector<4x1xf32> to vector<4x128xf32>
      %15 = arith.addf %12, %14 : vector<4x128xf32>
      %cst_14 = arith.constant 0.000000e+00 : f32
      %16 = vector.broadcast %cst_14 : f32 to vector<4x128xf32>
      %17 = arith.maximumf %15, %16 : vector<4x128xf32>
      %c0_15 = arith.constant 0 : index
      %c0_16 = arith.constant 0 : index
      %18 = vector.load %arg5[%c0_15, %c0_16] : memref<4x128xf32, #tpu.memory_space<vmem>>, vector<4x128xf32>
      tpu.vector_store %arg5[%c0_15, %c0_16], %17 {strides = array<i32>} : memref<4x128xf32, #tpu.memory_space<vmem>>, vector<4x128xf32>,
    } else {
    }
    return
  }
  func.func @transform_0(%arg0: i32, %arg1: i32) -> (i32, i32) {
    %c0_i32 = arith.constant 0 : i32
    %c0_i32_0 = arith.constant 0 : i32
    return %c0_i32, %arg1 : i32, i32
  }
  func.func @transform_1(%arg0: i32, %arg1: i32) -> (i32, i32) {
    %c0_i32 = arith.constant 0 : i32
    return %arg1, %arg0 : i32, i32
  }
  func.func @transform_2(%arg0: i32, %arg1: i32) -> (i32, i32) {
    %c0_i32 = arith.constant 0 : i32
    %c0_i32_0 = arith.constant 0 : i32
    %c0_i32_1 = arith.constant 0 : i32
    return %c0_i32, %c0_i32_0 : i32, i32
  }
  func.func @transform_3(%arg0: i32, %arg1: i32) -> (i32, i32) {
    %c0_i32 = arith.constant 0 : i32
    %c0_i32_0 = arith.constant 0 : i32
    return %c0_i32, %arg0 : i32, i32
  }
}

module attributes {stable_mosaic.version = 11 : i64} {
  func.func @_dual_head_kernel(%arg0: i32, %arg1: memref<1x2x128xbf16, #tpu.memory_space<vmem>>, %arg2: memref<1x128x256xbf16, #tpu.memory_space<vmem>>, %arg3: memref<1x1x256xf32, #tpu.memory_space<vmem>>, %arg4: memref<1x256x128xbf16, #tpu.memory_space<vmem>>, %arg5: memref<1x1x128xf32, #tpu.memory_space<vmem>>, %arg6: memref<1x2x128xf32, #tpu.memory_space<vmem>>) attributes {dimension_semantics = [#tpu.dimension_semantics<parallel>], iteration_bounds = array<i64: 2>, scalar_prefetch = 0 : i64, scratch_operands = 0 : i64, tpu.core_type = #tpu.core_type<tc>, window_params = [{transform_indices = @transform_0, window_bounds = array<i64: 1, 2, 128>}, {transform_indices = @transform_1, window_bounds = array<i64: 1, 128, 256>}, {transform_indices = @transform_2, window_bounds = array<i64: 1, 1, 256>}, {transform_indices = @transform_3, window_bounds = array<i64: 1, 256, 128>}, {transform_indices = @transform_4, window_bounds = array<i64: 1, 1, 128>}, {transform_indices = @transform_5, window_bounds = array<i64: 1, 2, 128>}]} {
    %c0 = arith.constant 0 : index
    %c0_0 = arith.constant 0 : index
    %c0_1 = arith.constant 0 : index
    %0 = vector.load %arg1[%c0, %c0_0, %c0_1] : memref<1x2x128xbf16, #tpu.memory_space<vmem>>, vector<1x2x128xbf16>
    %1 = vector.shape_cast %0 : vector<1x2x128xbf16> to vector<2x128xbf16>
    %c0_2 = arith.constant 0 : index
    %c0_3 = arith.constant 0 : index
    %c0_4 = arith.constant 0 : index
    %2 = vector.load %arg2[%c0_2, %c0_3, %c0_4] : memref<1x128x256xbf16, #tpu.memory_space<vmem>>, vector<1x128x256xbf16>
    %3 = vector.shape_cast %2 : vector<1x128x256xbf16> to vector<128x256xbf16>
    %cst = arith.constant dense<0.000000e+00> : vector<2x256xf32>
    %4 = tpu.matmul %1, %3, %cst {dimension_numbers = #tpu.dot_dimension_numbers<[1], [0], [0], [1], [0, 0, 1, 1], [], []>} : vector<2x128xbf16>, vector<128x256xbf16>, vector<2x256xf32> -> vector<2x256xf32>
    %c0_5 = arith.constant 0 : index
    %c0_6 = arith.constant 0 : index
    %c0_7 = arith.constant 0 : index
    %5 = vector.load %arg3[%c0_5, %c0_6, %c0_7] : memref<1x1x256xf32, #tpu.memory_space<vmem>>, vector<1x1x256xf32>
    %6 = vector.shape_cast %5 : vector<1x1x256xf32> to vector<1x256xf32>
    %7 = vector.broadcast %6 : vector<1x256xf32> to vector<2x256xf32>
    %8 = arith.addf %4, %7 : vector<2x256xf32>
    %cst_8 = arith.constant 0.000000e+00 : f32
    %9 = vector.broadcast %cst_8 : f32 to vector<2x256xf32>
    %10 = arith.maximumf %8, %9 : vector<2x256xf32>
    %11 = arith.truncf %10 : vector<2x256xf32> to vector<2x256xbf16>
    %c0_9 = arith.constant 0 : index
    %c0_10 = arith.constant 0 : index
    %c0_11 = arith.constant 0 : index
    %12 = vector.load %arg4[%c0_9, %c0_10, %c0_11] : memref<1x256x128xbf16, #tpu.memory_space<vmem>>, vector<1x256x128xbf16>
    %13 = vector.shape_cast %12 : vector<1x256x128xbf16> to vector<256x128xbf16>
    %cst_12 = arith.constant dense<0.000000e+00> : vector<2x128xf32>
    %14 = tpu.matmul %11, %13, %cst_12 {dimension_numbers = #tpu.dot_dimension_numbers<[1], [0], [0], [1], [0, 0, 1, 1], [], []>} : vector<2x256xbf16>, vector<256x128xbf16>, vector<2x128xf32> -> vector<2x128xf32>
    %c0_13 = arith.constant 0 : index
    %c0_14 = arith.constant 0 : index
    %c0_15 = arith.constant 0 : index
    %15 = vector.load %arg5[%c0_13, %c0_14, %c0_15] : memref<1x1x128xf32, #tpu.memory_space<vmem>>, vector<1x1x128xf32>
    %16 = vector.shape_cast %15 : vector<1x1x128xf32> to vector<1x128xf32>
    %17 = vector.broadcast %16 : vector<1x128xf32> to vector<2x128xf32>
    %18 = arith.addf %14, %17 : vector<2x128xf32>
    %cst_16 = arith.constant dense<0xFF800000> : vector<2xf32>
    %19 = vector.multi_reduction <maximumf>, %18, %cst_16 [1] : vector<2x128xf32> to vector<2xf32>
    %20 = vector.shape_cast %19 : vector<2xf32> to vector<2x1xf32>
    %21 = vector.broadcast %20 : vector<2x1xf32> to vector<2x128xf32>
    %22 = arith.subf %18, %21 : vector<2x128xf32>
    %23 = math.exp %22 : vector<2x128xf32>
    %cst_17 = arith.constant dense<0.000000e+00> : vector<2xf32>
    %24 = vector.multi_reduction <add>, %23, %cst_17 [1] : vector<2x128xf32> to vector<2xf32>
    %25 = vector.shape_cast %24 : vector<2xf32> to vector<2x1xf32>
    %26 = vector.broadcast %25 : vector<2x1xf32> to vector<2x128xf32>
    %27 = arith.divf %23, %26 : vector<2x128xf32>
    %c0_18 = arith.constant 0 : index
    %c0_19 = arith.constant 0 : index
    %c0_20 = arith.constant 0 : index
    %28 = vector.load %arg6[%c0_18, %c0_19, %c0_20] : memref<1x2x128xf32, #tpu.memory_space<vmem>>, vector<1x2x128xf32>
    %29 = vector.shape_cast %28 : vector<1x2x128xf32> to vector<2x128xf32>
    %30 = vector.shape_cast %27 : vector<2x128xf32> to vector<1x2x128xf32>
    tpu.vector_store %arg6[%c0_18, %c0_19, %c0_20], %30 {strides = array<i32>} : memref<1x2x128xf32, #tpu.memory_space<vmem>>, vector<1x2x128xf32>,
    return
  }
  func.func @transform_0(%arg0: i32) -> (i32, i32, i32) {
    %c0_i32 = arith.constant 0 : i32
    %c0_i32_0 = arith.constant 0 : i32
    %c0_i32_1 = arith.constant 0 : i32
    return %arg0, %c0_i32, %c0_i32_0 : i32, i32, i32
  }
  func.func @transform_1(%arg0: i32) -> (i32, i32, i32) {
    %c0_i32 = arith.constant 0 : i32
    %c0_i32_0 = arith.constant 0 : i32
    %c0_i32_1 = arith.constant 0 : i32
    return %arg0, %c0_i32, %c0_i32_0 : i32, i32, i32
  }
  func.func @transform_2(%arg0: i32) -> (i32, i32, i32) {
    %c0_i32 = arith.constant 0 : i32
    %c0_i32_0 = arith.constant 0 : i32
    %c0_i32_1 = arith.constant 0 : i32
    return %arg0, %c0_i32, %c0_i32_0 : i32, i32, i32
  }
  func.func @transform_3(%arg0: i32) -> (i32, i32, i32) {
    %c0_i32 = arith.constant 0 : i32
    %c0_i32_0 = arith.constant 0 : i32
    %c0_i32_1 = arith.constant 0 : i32
    return %arg0, %c0_i32, %c0_i32_0 : i32, i32, i32
  }
  func.func @transform_4(%arg0: i32) -> (i32, i32, i32) {
    %c0_i32 = arith.constant 0 : i32
    %c0_i32_0 = arith.constant 0 : i32
    %c0_i32_1 = arith.constant 0 : i32
    return %arg0, %c0_i32, %c0_i32_0 : i32, i32, i32
  }
  func.func @transform_5(%arg0: i32) -> (i32, i32, i32) {
    %c0_i32 = arith.constant 0 : i32
    %c0_i32_0 = arith.constant 0 : i32
    %c0_i32_1 = arith.constant 0 : i32
    return %arg0, %c0_i32, %c0_i32_0 : i32, i32, i32
  }
}

</mosaic_0001>

<llo_original>
// kernel: dscnet_forward.5
$region0: #{dscnet_forward.5}
  #allocation0 [shape = 'u32[]', space=smem, size = 0x4, offset = 0x4, fixed_abs, tag = 'smem constant byte address 0x4 - core index']
  #allocation1 [shape = 'u32[144,128]{1,0:T(1,128)}', space=vmem, size = 0x12000, scoped, tag = 'internal scratch']
  #allocation2 [shape = 'f32[4,128]{1,0:T(4,128)}', space=vmem, size = 0x800, scoped, tag = 'scratch operand']
  %s0 = inlined_call_operand.vmem [shape: bf16[4,16], index: 0, kind: input, shape index: {}]
  %s1 = inlined_call_operand.vmem [shape: bf16[16,256], index: 1, kind: input, shape index: {}]
  %s2 = inlined_call_operand.vmem [shape: f32[4,1], index: 2, kind: input, shape index: {}]
  %s3 = inlined_call_operand.vmem [shape: bf16[4,256], index: 3, kind: output, shape index: {}]
  %s4 = sld [smem:[#allocation0]]
  $region94: #{dscnet_forward.5} parent=0
    _
  %s6 = ssub.s32 1, %s4
  %s7 = scalar_select 0, %s6, %s4
  $region1: #{dscnet_forward.5} parent=0
    #allocation3 [shape = 'u8[8192]{0}', space=vmem, size = 0x2000, scoped, tag = 'input window, operand 1']
    loop: start=0, step=1, limit=4
    $region2: #{dscnet_forward.5} parent=1 // loop_pre_header
      _
    $region3: #{dscnet_forward.5} parent=1 // loop_header
      %s9 = sphi 0, %s13
      %p10 = scmp.ge.s32.totalorder %s9, 4
      %s16 = sphi 0, %s28
      %s17 = sphi 0, %s24
      %s18 = sphi 0, %s16
      %s19 = sphi 0, %s17
      %s20 = sphi 0, %s18
      %s21 = sphi 0, %s19
      %s31 = sphi 0, %s33
      %s34 = sphi 0, %s31
      %s35 = sphi 0, %s34
      %s51 = sphi 0, %s35
      %s59 = sphi 0, %s61
      %s62 = sphi 0, %s59
      %s63 = sphi 0, %s62
      %s79 = sphi 0, %s63
      %s83 = sphi 0, %s83
      %s85 = sphi 0, %s83
      %s86 = sphi 0, %s85
      %s100 = sphi 0, %s86
      %s106 = sphi 0, %s108
      %s109 = sphi 0, %s106
      %s110 = sphi 0, %s109
      %s126 = sphi 0, %s110
    $region4: #{dscnet_forward.5} parent=1 // loop_header_branch
      %12 = sbr.rel (%p10) target = $region8
    $region5: #{dscnet_forward.5} parent=1 // loop_body
      %s14 = ssub.s32 %s9, 1
      %s15 = ssub.s32 %s9, 2
      %s22 = sadd.s32 1, %s17
      %p23 = scmp.ge.s32.totalorder %s22, 1
      %s24 = scalar_select %p23, 0, %s22
      %s25 = sadd.s32 1, %s16
      %s26 = scalar_select %p23, %s25, %s16
      %p27 = scmp.ge.s32.totalorder %s26, 2
      %s28 = scalar_select %p27, 0, %s26
      %s29 = ssub.s32 %s17, %s24
      %p30 = scmp.eq.s32.totalorder %s29, 0
      %s32 = sadd.s32 %s31, 1
      %s33 = scalar_select %p30, %s31, %s32
      %p36 = pneg %p30
      %p37 = scmp.eq.s32.totalorder %s9, 1
      %p38 = por %p36, %p37
      %p39 = scmp.ne.s32.totalorder %s31, %s34
      %p40 = scmp.eq.s32.totalorder %s9, 0
      %p41 = por %p39, %p40
      %p42 = scmp.ne.s32.totalorder %s31, %s34
      %p43 = scmp.eq.s32.totalorder %s14, 1
      %p44 = por %p42, %p43
      %p45 = scmp.ne.s32.totalorder %s34, %s35
      %p46 = scmp.eq.s32.totalorder %s14, 0
      %p47 = por %p45, %p46
      %p48 = scmp.ne.s32.totalorder %s34, %s35
      %p49 = scmp.eq.s32.totalorder %s15, 1
      %p50 = por %p48, %p49
      %p52 = scmp.ne.s32.totalorder %s35, %s51
      %p53 = scmp.eq.s32.totalorder %s15, 0
      %p54 = por %p52, %p53
      %s55 = ssub.s32 %s17, %s24
      %s56 = ssub.s32 %s16, %s28
      %s57 = sor.u32 %s55, %s56
      %p58 = scmp.eq.s32.totalorder %s57, 0
      %s60 = sadd.s32 %s59, 1
      %s61 = scalar_select %p58, %s59, %s60
      %p64 = pneg %p58
      %p65 = scmp.eq.s32.totalorder %s9, 1
      %p66 = por %p64, %p65
      %p67 = scmp.ne.s32.totalorder %s59, %s62
      %p68 = scmp.eq.s32.totalorder %s9, 0
      %p69 = por %p67, %p68
      %p70 = scmp.ne.s32.totalorder %s59, %s62
      %p71 = scmp.eq.s32.totalorder %s14, 1
      %p72 = por %p70, %p71
      %p73 = scmp.ne.s32.totalorder %s62, %s63
      %p74 = scmp.eq.s32.totalorder %s14, 0
      %p75 = por %p73, %p74
      %p76 = scmp.ne.s32.totalorder %s62, %s63
      %p77 = scmp.eq.s32.totalorder %s15, 1
      %p78 = por %p76, %p77
      %p80 = scmp.ne.s32.totalorder %s63, %s79
      %p81 = scmp.eq.s32.totalorder %s15, 0
      %p82 = por %p80, %p81
      %s84 = sadd.s32 %s83, 1
      %p87 = scmp.eq.s32.totalorder %s9, 1
      %p88 = scmp.ne.s32.totalorder %s83, %s85
      %p89 = scmp.eq.s32.totalorder %s9, 0
      %p90 = por %p88, %p89
      %p91 = scmp.ne.s32.totalorder %s83, %s85
      %p92 = scmp.eq.s32.totalorder %s14, 1
      %p93 = por %p91, %p92
      %p94 = scmp.ne.s32.totalorder %s85, %s86
      %p95 = scmp.eq.s32.totalorder %s14, 0
      %p96 = por %p94, %p95
      %p97 = scmp.ne.s32.totalorder %s85, %s86
      %p98 = scmp.eq.s32.totalorder %s15, 1
      %p99 = por %p97, %p98
      %p101 = scmp.ne.s32.totalorder %s86, %s100
      %p102 = scmp.eq.s32.totalorder %s15, 0
      %p103 = por %p101, %p102
      %s104 = ssub.s32 %s16, %s28
      %p105 = scmp.eq.s32.totalorder %s104, 0
      %s107 = sadd.s32 %s106, 1
      %s108 = scalar_select %p105, %s106, %s107
      %p111 = pneg %p105
      %p112 = scmp.eq.s32.totalorder %s9, 1
      %p113 = por %p111, %p112
      %p114 = scmp.ne.s32.totalorder %s106, %s109
      %p115 = scmp.eq.s32.totalorder %s9, 0
      %p116 = por %p114, %p115
      %p117 = scmp.ne.s32.totalorder %s106, %s109
      %p118 = scmp.eq.s32.totalorder %s14, 1
      %p119 = por %p117, %p118
      %p120 = scmp.ne.s32.totalorder %s109, %s110
      %p121 = scmp.eq.s32.totalorder %s14, 0
      %p122 = por %p120, %p121
      %p123 = scmp.ne.s32.totalorder %s109, %s110
      %p124 = scmp.eq.s32.totalorder %s15, 1
      %p125 = por %p123, %p124
      %p127 = scmp.ne.s32.totalorder %s110, %s126
      %p128 = scmp.eq.s32.totalorder %s15, 0
      %p129 = por %p127, %p128
      %p130 = scmp.le.s32.totalorder 1, %s9
      %p131 = scmp.lt.s32.totalorder %s9, 3
      %p132 = pnand %p130, %p131
      %p133 = pneg %p132
      // Predicated region
      $region9: #{dscnet_forward.5} parent=5 // pred_check
        _
      $region10: #{dscnet_forward.5} parent=5 // pred_check_branch
        %135 = sbr.rel (%p132) target = $region12
      $region11: #{dscnet_forward.5} parent=5 // pred_region
        %s136 = ssub.s32 %s9, 1
        // Predicated region
        $region13: #{dscnet_forward.5} parent=11 // pred_check
          %p137 = pneg %p47
        $region14: #{dscnet_forward.5} parent=11 // pred_check_branch
          %139 = sbr.rel (%p137) target = $region16
        $region15: #{dscnet_forward.5} parent=11 // pred_region
          %p140 = scmp.lt.s32.totalorder %s19, 0
          %s141 = scalar_select %p140, %s19, 0
          %s142 = smul.addr %s141, 2
          %s143 = scalar_lea.vmem %s0, %s142
        $region16: #{dscnet_forward.5} parent=11 // pred_fallthru
          _
        // Predicated region
        $region17: #{dscnet_forward.5} parent=11 // pred_check
          %p144 = pneg %p96
        $region18: #{dscnet_forward.5} parent=11 // pred_check_branch
          %146 = sbr.rel (%p144) target = $region20
        $region19: #{dscnet_forward.5} parent=11 // pred_region
          _
        $region20: #{dscnet_forward.5} parent=11 // pred_fallthru
          _
      $region12: #{dscnet_forward.5} parent=5 // pred_fallthru
        _
      %p147 = scmp.lt.s32.totalorder %s9, 2
      // Predicated region
      $region21: #{dscnet_forward.5} parent=5 // pred_check
        %p148 = pneg %p147
      $region22: #{dscnet_forward.5} parent=5 // pred_check_branch
        %150 = sbr.rel (%p148) target = $region24
      $region23: #{dscnet_forward.5} parent=5 // pred_region
        // Predicated region
        $region25: #{dscnet_forward.5} parent=23 // pred_check
          %p151 = pneg %p69
        $region26: #{dscnet_forward.5} parent=23 // pred_check_branch
          %153 = sbr.rel (%p151) target = $region28
        $region27: #{dscnet_forward.5} parent=23 // pred_region
          %s154 = sand.u32 %s59, 1
          %s155 = sand.u32 %s59, 1
          %s156 = smul.addr %s155, 8
          %s157 = scalar_lea.vmem [#allocation3], %s156
          %s158 = smul.u32 2, %s17
          %s159 = smul.addr %s158, 2
          %s160 = sadd.s32 %s16, %s159
          %s161 = smul.addr %s160, 4
          %s162 = scalar_lea.vmem %s1, %s161
          // Predicated region
          $region29: #{dscnet_forward.5} parent=27 // pred_check
            _
          $region30: #{dscnet_forward.5} parent=27 // pred_check_branch
            %164 = sbr.rel (0) target = $region32
          $region31: #{dscnet_forward.5} parent=27 // pred_region
            // Predicated region
            $region33: #{dscnet_forward.5} parent=31 // pred_check
              _
            $region34: #{dscnet_forward.5} parent=31 // pred_check_branch
              %166 = sbr.rel target = $region36
            $region35: #{dscnet_forward.5} parent=31 // pred_region
              // Predicated region
              $region48: #{dscnet_forward.5} parent=35 // pred_check
                _
              $region49: #{dscnet_forward.5} parent=35 // pred_check_branch
                %183 = sbr.rel (0) target = $region51
              $region50: #{dscnet_forward.5} parent=35 // pred_region
                loop: start=0, step=1, limit=1
                $region52: #{dscnet_forward.5} parent=50 // loop_pre_header
                  _
                $region53: #{dscnet_forward.5} parent=50 // loop_header
                  %s185 = sphi 0, %s189
                  %p186 = scmp.ge.s32.totalorder %s185, 1
                  %s190 = sphi %s162, %s162
                  %s191 = sphi %s157, %s157
                $region54: #{dscnet_forward.5} parent=50 // loop_header_branch
                  %188 = sbr.rel (%p186) target = $region58
                $region55: #{dscnet_forward.5} parent=50 // loop_body
                  _
                $region56: #{dscnet_forward.5} parent=50 // loop_footer
                  %s189 = sadd.s32 1, %s185
                $region57: #{dscnet_forward.5} parent=50 // loop_footer_branch
                  %184 = sbr.rel target = $region53
                $region58: #{dscnet_forward.5} parent=50 // loop_exit
                  _
                loop: start=0, step=1, limit=1
                $region59: #{dscnet_forward.5} parent=50 // loop_pre_header
                  _
                $region60: #{dscnet_forward.5} parent=50 // loop_header
                  %s194 = sphi 0, %s198
                  %p195 = scmp.ge.s32.totalorder %s194, 1
                  %s199 = sphi %s162, %s162
                  %s200 = sphi %s157, %s157
                $region61: #{dscnet_forward.5} parent=50 // loop_header_branch
                  %197 = sbr.rel (%p195) target = $region65
                $region62: #{dscnet_forward.5} parent=50 // loop_body
                  %v201 = vld [vmem:[%s199] sm:$0xf]
                  %202 = vst [vmem:[%s200] sm:$0xf] %v201
                  %v203 = vld [vmem:[%s199 + $0x8] sm:$0xf]
                  %204 = vst [vmem:[%s200 + $0x4] sm:$0xf] %v203
                $region63: #{dscnet_forward.5} parent=50 // loop_footer
                  %s198 = sadd.s32 1, %s194
                $region64: #{dscnet_forward.5} parent=50 // loop_footer_branch
                  %193 = sbr.rel target = $region60
                $region65: #{dscnet_forward.5} parent=50 // loop_exit
                  _
              $region51: #{dscnet_forward.5} parent=35 // pred_fallthru
                _
            $region36: #{dscnet_forward.5} parent=31 // pred_fallthru
              _
            // Predicated region
            $region37: #{dscnet_forward.5} parent=31 // pred_check
              _
            $region38: #{dscnet_forward.5} parent=31 // pred_check_branch
              %168 = sbr.rel (0) target = $region40
            $region39: #{dscnet_forward.5} parent=31 // pred_region
              loop: start=0, step=1, limit=1
              $region41: #{dscnet_forward.5} parent=39 // loop_pre_header
                _
              $region42: #{dscnet_forward.5} parent=39 // loop_header
                %s171 = sphi 0, %s175
                %p172 = scmp.ge.s32.totalorder %s171, 1
                %s176 = sphi %s162, %s162
                %s177 = sphi %s157, %s157
              $region43: #{dscnet_forward.5} parent=39 // loop_header_branch
                %174 = sbr.rel (%p172) target = $region47
              $region44: #{dscnet_forward.5} parent=39 // loop_body
                %v178 = vld [vmem:[%s176] sm:$0xf]
                %179 = vst [vmem:[%s177] sm:$0xf] %v178
                %v180 = vld [vmem:[%s176 + $0x8] sm:$0xf]
                %181 = vst [vmem:[%s177 + $0x4] sm:$0xf] %v180
              $region45: #{dscnet_forward.5} parent=39 // loop_footer
                %s175 = sadd.s32 1, %s171
              $region46: #{dscnet_forward.5} parent=39 // loop_footer_branch
                %170 = sbr.rel target = $region42
              $region47: #{dscnet_forward.5} parent=39 // loop_exit
                _
            $region40: #{dscnet_forward.5} parent=31 // pred_fallthru
              _
          $region32: #{dscnet_forward.5} parent=27 // pred_fallthru
            _
          %205 = vnop
        $region28: #{dscnet_forward.5} parent=23 // pred_fallthru
          _
      $region24: #{dscnet_forward.5} parent=5 // pred_fallthru
        _
      %p206 = scmp.le.s32.totalorder 1, %s9
      %p207 = scmp.lt.s32.totalorder %s9, 3
      %p208 = pnand %p206, %p207
      %p209 = pneg %p208
      // Predicated region
      $region66: #{dscnet_forward.5} parent=5 // pred_check
        _
      $region67: #{dscnet_forward.5} parent=5 // pred_check_branch
        %211 = sbr.rel (%p208) target = $region69
      $region68: #{dscnet_forward.5} parent=5 // pred_region
        %s212 = ssub.s32 %s9, 1
        %s213 = sand.u32 %s62, 1
        %s214 = sand.u32 %s62, 1
        %s215 = smul.addr %s214, 8
        %s216 = scalar_lea.vmem [#allocation3], %s215
        // Predicated region
        $region70: #{dscnet_forward.5} parent=68 // pred_check
          %p217 = pneg %p75
        $region71: #{dscnet_forward.5} parent=68 // pred_check_branch
          %219 = sbr.rel (%p217) target = $region73
        $region72: #{dscnet_forward.5} parent=68 // pred_region
          _
        $region73: #{dscnet_forward.5} parent=68 // pred_fallthru
          _
        %p220 = scmp.lt.s32.totalorder %s19, 0
        %s221 = scalar_select %p220, %s19, 0
        %s222 = smul.addr %s221, 2
        %s223 = scalar_lea.vmem %s0, %s222
        %p224 = pneg %p47
        %p225 = pneg %p44
        %s226 = sand.u32 %s62, 1
        %s227 = sand.u32 %s62, 1
        %s228 = smul.addr %s227, 8
        %s229 = scalar_lea.vmem [#allocation3], %s228
        %p230 = pneg %p75
        %p231 = pneg %p72
        %p232 = pneg %p96
        %p233 = pneg %p93
        %p234 = pneg %p122
        %p235 = pneg %p119
        %p236 = scmp.lt.s32.totalorder %s18, 1
        %s237 = scalar_select %p236, %s18, 1
        %s238 = smul.addr %s237, 2
        %s239 = scalar_lea.vmem %s3, %s238
        %p240 = scmp.lt.s32.totalorder %s19, 0
        %s241 = scalar_select %p240, %s19, 0
        %s242 = smul.addr %s241, 2
        %s243 = scalar_lea.vmem %s0, %s242
        %s244 = smul.u32 2, %s19
        %p245 = scmp.lt.s32.totalorder %s18, 1
        %s246 = scalar_select %p245, %s18, 1
        %s247 = smul.addr %s246, 2
        %s248 = scalar_lea.vmem %s3, %s247
        %p250 = scmp.eq.s32.totalorder %s19, 0
        // Predicated region
        $region74: #{dscnet_forward.5} parent=68 // pred_check
          %p251 = pneg %p250
        $region75: #{dscnet_forward.5} parent=68 // pred_check_branch
          %253 = sbr.rel (%p251) target = $region77
        $region76: #{dscnet_forward.5} parent=68 // pred_region
          %254 = vst [vmem:[#allocation2] sm:$0xf] 0.0
        $region77: #{dscnet_forward.5} parent=68 // pred_fallthru
          _
        %v255 = vld [vmem:[#allocation2] sm:$0xf]
        %v256 = vld [vmem:[%s243] sm:$0x3]
        %v257 = vld [vmem:[%s216] sm:$0xf]
        %v258 = vld [vmem:[%s216 + $0x4] sm:$0xf]
        %v261 = vunpack.c.l.b16 %v257
        %v262 = vunpack.c.l.b16 %v258
        %v263 = vpack.c.b16 %v262, %v261
        %vm265 = vcmask 130048
        %v267 = vsel %vm265, %v256, 0
        %269 = vmatprep.subr.bf16.mxu0 0
        %270 = vmatpush1.bf16.msra.mxu0 %v263
        %271 = vmatprep.subr.bf16.mxu0 0
        %272 = vmatpush1.bf16.msra.mxu0 0
        %273 = vmatprep.subr.bf16.mxu0 0
        %274 = vmatpush1.bf16.msra.mxu0 0
        %275 = vmatprep.subr.bf16.mxu0 0
        %276 = vmatpush1.bf16.msra.mxu0 0
        %277 = vmatprep.subr.bf16.mxu0 0
        %278 = vmatpush1.bf16.msra.mxu0 0
        %279 = vmatprep.subr.bf16.mxu0 0
        %280 = vmatpush1.bf16.msra.mxu0 0
        %281 = vmatprep.subr.bf16.mxu0 0
        %282 = vmatpush1.bf16.msra.mxu0 0
        %283 = vmatprep.subr.bf16.mxu0 0
        %284 = vmatpush1.bf16.msra.mxu0 0
        %285 = vmatprep.subr.bf16.mxu0 0
        %286 = vmatpush1.bf16.msra.mxu0 0
        %287 = vmatprep.subr.bf16.mxu0 0
        %288 = vmatpush1.bf16.msra.mxu0 0
        %289 = vmatprep.subr.bf16.mxu0 0
        %290 = vmatpush1.bf16.msra.mxu0 0
        %291 = vmatprep.subr.bf16.mxu0 0
        %292 = vmatpush1.bf16.msra.mxu0 0
        %293 = vmatprep.subr.bf16.mxu0 0
        %294 = vmatpush1.bf16.msra.mxu0 0
        %295 = vmatprep.subr.bf16.mxu0 0
        %296 = vmatpush1.bf16.msra.mxu0 0
        %297 = vmatprep.subr.bf16.mxu0 0
        %298 = vmatpush1.bf16.msra.mxu0 0
        %299 = vmatprep.subr.bf16.mxu0 0
        %300 = vmatpush1.bf16.msra.mxu0 0
        %301 = vmatprep.mubr.bf16.mxu0 0
        %302 = vmatmul.mubr.bf16.gmra.mrb[0].mxu0 %v267
        %v303 = vpop.f32.mrb[0].mxu0
        %v304 = vadd.f32 0.0, %v303
        %v305 = vpop.f32.mrb[0].mxu0
        %v306 = vpop.f32.mrb[0].mxu0
        %v307 = vpop.f32.mrb[0].mxu0
        %308 = vdwg.mxu0
        %v309 = vadd.f32 %v255, %v304
        %310 = vst [vmem:[#allocation2] sm:$0xf] %v309
        // Predicated region
        $region78: #{dscnet_forward.5} parent=68 // pred_check
          %p311 = pneg %p250
        $region79: #{dscnet_forward.5} parent=68 // pred_check_branch
          %313 = sbr.rel (%p311) target = $region81
        $region80: #{dscnet_forward.5} parent=68 // pred_region
          %v314 = vld [vmem:[#allocation2] sm:$0xf]
          %v315 = vld [vmem:[%s2] sm:$0xf]
          %317 = vset.pattern.permute.xlu0 0
          %318 = vperm.xlu0 %317, %v315
          %v319 = vpop.permute.xlu0 %318
          %v321 = vadd.f32 %v314, %v319
          %v322 = vmax.f32 %v321, 0.0
          %v323 = vpack.c.bf16 %v322, %v322
          %324 = vst [vmem:[%s248] sm:$0x3] %v323
        $region81: #{dscnet_forward.5} parent=68 // pred_fallthru
          _
        %p325 = scmp.lt.s32.totalorder %s18, 1
        %s326 = scalar_select %p325, %s18, 1
        %s327 = smul.addr %s326, 2
        %s328 = scalar_lea.vmem %s3, %s327
        // Predicated region
        $region82: #{dscnet_forward.5} parent=68 // pred_check
          %p329 = pneg %p119
        $region83: #{dscnet_forward.5} parent=68 // pred_check_branch
          %331 = sbr.rel (%p329) target = $region85
        $region84: #{dscnet_forward.5} parent=68 // pred_region
          _
        $region85: #{dscnet_forward.5} parent=68 // pred_fallthru
          _
      $region69: #{dscnet_forward.5} parent=5 // pred_fallthru
        _
      %p332 = scmp.le.s32.totalorder 2, %s9
      // Predicated region
      $region86: #{dscnet_forward.5} parent=5 // pred_check
        %p333 = pneg %p332
      $region87: #{dscnet_forward.5} parent=5 // pred_check_branch
        %335 = sbr.rel (%p333) target = $region89
      $region88: #{dscnet_forward.5} parent=5 // pred_region
        %s336 = ssub.s32 %s9, 2
        // Predicated region
        $region90: #{dscnet_forward.5} parent=88 // pred_check
          %p337 = pneg %p125
        $region91: #{dscnet_forward.5} parent=88 // pred_check_branch
          %339 = sbr.rel (%p337) target = $region93
        $region92: #{dscnet_forward.5} parent=88 // pred_region
          %p340 = scmp.lt.s32.totalorder %s20, 1
          %s341 = scalar_select %p340, %s20, 1
          %s342 = smul.addr %s341, 2
          %s343 = scalar_lea.vmem %s3, %s342
        $region93: #{dscnet_forward.5} parent=88 // pred_fallthru
          _
      $region89: #{dscnet_forward.5} parent=5 // pred_fallthru
        _
    $region6: #{dscnet_forward.5} parent=1 // loop_footer
      %s13 = sadd.s32 1, %s9
    $region7: #{dscnet_forward.5} parent=1 // loop_footer_branch
      %8 = sbr.rel target = $region3
    $region8: #{dscnet_forward.5} parent=1 // loop_exit
      _

// kernel: dscnet_forward.6
$region0: #{dscnet_forward.6}
  #allocation0 [shape = 'u32[]', space=smem, size = 0x4, offset = 0x4, fixed_abs, tag = 'smem constant byte address 0x4 - core index']
  #allocation1 [shape = 'u32[144,128]{1,0:T(1,128)}', space=vmem, size = 0x12000, scoped, tag = 'internal scratch']
  #allocation2 [shape = 'f32[8,64]{1,0:T(8,128)}', space=vmem, size = 0x1000, scoped, tag = 'scratch operand']
  %s0 = inlined_call_operand.vmem [shape: bf16[8,48], index: 0, kind: input, shape index: {}]
  %s1 = inlined_call_operand.vmem [shape: bf16[48,64], index: 1, kind: input, shape index: {}]
  %s2 = inlined_call_operand.vmem [shape: f32[8,1], index: 2, kind: input, shape index: {}]
  %s3 = inlined_call_operand.vmem [shape: f32[8,64], index: 3, kind: output, shape index: {}]
  %s4 = sld [smem:[#allocation0]]
  $region30: #{dscnet_forward.6} parent=0
    _
  %s6 = ssub.s32 1, %s4
  %s7 = scalar_select 0, %s6, %s4
  // Predicated region
  $region2: #{dscnet_forward.6} parent=0 // pred_check
    _
  $region3: #{dscnet_forward.6} parent=0 // pred_check_branch
    %9 = sbr.rel (0) target = $region5
  $region4: #{dscnet_forward.6} parent=0 // pred_region
    _
  $region5: #{dscnet_forward.6} parent=0 // pred_fallthru
    _
  // Predicated region
  $region6: #{dscnet_forward.6} parent=0 // pred_check
    _
  $region7: #{dscnet_forward.6} parent=0 // pred_check_branch
    %11 = sbr.rel (0) target = $region9
  $region8: #{dscnet_forward.6} parent=0 // pred_region
    _
  $region9: #{dscnet_forward.6} parent=0 // pred_fallthru
    _
  // Predicated region
  $region10: #{dscnet_forward.6} parent=0 // pred_check
    _
  $region11: #{dscnet_forward.6} parent=0 // pred_check_branch
    %13 = sbr.rel (0) target = $region13
  $region12: #{dscnet_forward.6} parent=0 // pred_region
    _
  $region13: #{dscnet_forward.6} parent=0 // pred_fallthru
    _
  %p15 = scmp.eq.s32.totalorder 0, 0
  // Predicated region
  $region14: #{dscnet_forward.6} parent=0 // pred_check
    %p16 = pneg %p15
  $region15: #{dscnet_forward.6} parent=0 // pred_check_branch
    %18 = sbr.rel (%p16) target = $region17
  $region16: #{dscnet_forward.6} parent=0 // pred_region
    %vm19 = vcmask 523264
    %20 = vst.msk [vmem:[#allocation2] sm:$0xff] %vm19, 0.0
  $region17: #{dscnet_forward.6} parent=0 // pred_fallthru
    _
  %v21 = vld [vmem:[#allocation2] sm:$0xff]
  %v22 = vld [vmem:[%s0] sm:$0xf]
  %v23 = vld [vmem:[%s1] sm:$0xf]
  %v24 = vld [vmem:[%s1 + $0x4] sm:$0xf]
  %v25 = vld [vmem:[%s1 + $0x8] sm:$0xf]
  %v26 = vld [vmem:[%s1 + $0xc] sm:$0xf]
  %v27 = vld [vmem:[%s1 + $0x10] sm:$0xf]
  %v28 = vld [vmem:[%s1 + $0x14] sm:$0xf]
  %v35 = vunpack.c.l.b16 %v23
  %v36 = vunpack.c.l.b16 %v24
  %v37 = vunpack.c.l.b16 %v25
  %v38 = vunpack.c.l.b16 %v26
  %v39 = vunpack.c.l.b16 %v27
  %v40 = vunpack.c.l.b16 %v28
  %v41 = vpack.c.b16 %v36, %v35
  %v42 = vpack.c.b16 %v38, %v37
  %v43 = vpack.c.b16 %v40, %v39
  %vm47 = vcmask 392192
  %v49 = vsel %vm47, %v22, 0
  %51 = vmatprep.subr.bf16.mxu0 0
  %52 = vmatpush1.bf16.msra.mxu0 %v41
  %53 = vmatprep.subr.bf16.mxu0 0
  %54 = vmatpush1.bf16.msra.mxu0 %v42
  %55 = vmatprep.subr.bf16.mxu0 0
  %56 = vmatpush1.bf16.msra.mxu0 %v43
  %57 = vmatprep.subr.bf16.mxu0 0
  %58 = vmatpush1.bf16.msra.mxu0 0
  %59 = vmatprep.subr.bf16.mxu0 0
  %60 = vmatpush1.bf16.msra.mxu0 0
  %61 = vmatprep.subr.bf16.mxu0 0
  %62 = vmatpush1.bf16.msra.mxu0 0
  %63 = vmatprep.subr.bf16.mxu0 0
  %64 = vmatpush1.bf16.msra.mxu0 0
  %65 = vmatprep.subr.bf16.mxu0 0
  %66 = vmatpush1.bf16.msra.mxu0 0
  %67 = vmatprep.subr.bf16.mxu0 0
  %68 = vmatpush1.bf16.msra.mxu0 0
  %69 = vmatprep.subr.bf16.mxu0 0
  %70 = vmatpush1.bf16.msra.mxu0 0
  %71 = vmatprep.subr.bf16.mxu0 0
  %72 = vmatpush1.bf16.msra.mxu0 0
  %73 = vmatprep.subr.bf16.mxu0 0
  %74 = vmatpush1.bf16.msra.mxu0 0
  %75 = vmatprep.subr.bf16.mxu0 0
  %76 = vmatpush1.bf16.msra.mxu0 0
  %77 = vmatprep.subr.bf16.mxu0 0
  %78 = vmatpush1.bf16.msra.mxu0 0
  %79 = vmatprep.subr.bf16.mxu0 0
  %80 = vmatpush1.bf16.msra.mxu0 0
  %81 = vmatprep.subr.bf16.mxu0 0
  %82 = vmatpush1.bf16.msra.mxu0 0
  %83 = vmatprep.mubr.bf16.mxu0 0
  %84 = vmatmul.mubr.bf16.gmra.mrb[0].mxu0 %v49
  %v85 = vpop.f32.mrb[0].mxu0
  %v86 = vadd.f32 0.0, %v85
  %v87 = vpop.f32.mrb[0].mxu0
  %v88 = vpop.f32.mrb[0].mxu0
  %v89 = vpop.f32.mrb[0].mxu0
  %90 = vdwg.mxu0
  %v91 = vadd.f32 %v21, %v86
  %vm92 = vcmask 523264
  %93 = vst.msk [vmem:[#allocation2] sm:$0xff] %vm92, %v91
  // Predicated region
  $region18: #{dscnet_forward.6} parent=0 // pred_check
    %p94 = pneg %p15
  $region19: #{dscnet_forward.6} parent=0 // pred_check_branch
    %96 = sbr.rel (%p94) target = $region21
  $region20: #{dscnet_forward.6} parent=0 // pred_region
    %v97 = vld [vmem:[#allocation2] sm:$0xff]
    %v98 = vld [vmem:[%s2] sm:$0xff]
    %100 = vset.pattern.permute.xlu0 0
    %101 = vperm.xlu0 %100, %v98
    %v102 = vpop.permute.xlu0 %101
    %v104 = vadd.f32 %v97, %v102
    %v105 = vmax.f32 %v104, 0.0
    %106 = vst.msk [vmem:[%s3] sm:$0xff] %vm92, %v105
  $region21: #{dscnet_forward.6} parent=0 // pred_fallthru
    _
  // Predicated region
  $region22: #{dscnet_forward.6} parent=0 // pred_check
    _
  $region23: #{dscnet_forward.6} parent=0 // pred_check_branch
    %108 = sbr.rel (0) target = $region25
  $region24: #{dscnet_forward.6} parent=0 // pred_region
    _
  $region25: #{dscnet_forward.6} parent=0 // pred_fallthru
    _
  // Predicated region
  $region26: #{dscnet_forward.6} parent=0 // pred_check
    _
  $region27: #{dscnet_forward.6} parent=0 // pred_check_branch
    %110 = sbr.rel (0) target = $region29
  $region28: #{dscnet_forward.6} parent=0 // pred_region
    _
  $region29: #{dscnet_forward.6} parent=0 // pred_fallthru
    _

// kernel: dscnet_forward.7
$region0: #{dscnet_forward.7}
  #allocation0 [shape = 'u32[]', space=smem, size = 0x4, offset = 0x4, fixed_abs, tag = 'smem constant byte address 0x4 - core index']
  #allocation1 [shape = 'u32[144,128]{1,0:T(1,128)}', space=vmem, size = 0x12000, scoped, tag = 'internal scratch']
  #allocation2 [shape = 'f32[16,64]{1,0:T(8,128)}', space=vmem, size = 0x2000, scoped, tag = 'scratch operand']
  %s0 = inlined_call_operand.vmem [shape: bf16[16,32], index: 0, kind: input, shape index: {}]
  %s1 = inlined_call_operand.vmem [shape: bf16[32,64], index: 1, kind: input, shape index: {}]
  %s2 = inlined_call_operand.vmem [shape: f32[16,1], index: 2, kind: input, shape index: {}]
  %s3 = inlined_call_operand.vmem [shape: bf16[16,64], index: 3, kind: output, shape index: {}]
  %s4 = sld [smem:[#allocation0]]
  $region30: #{dscnet_forward.7} parent=0
    _
  %s6 = ssub.s32 1, %s4
  %s7 = scalar_select 0, %s6, %s4
  // Predicated region
  $region2: #{dscnet_forward.7} parent=0 // pred_check
    _
  $region3: #{dscnet_forward.7} parent=0 // pred_check_branch
    %9 = sbr.rel (0) target = $region5
  $region4: #{dscnet_forward.7} parent=0 // pred_region
    _
  $region5: #{dscnet_forward.7} parent=0 // pred_fallthru
    _
  // Predicated region
  $region6: #{dscnet_forward.7} parent=0 // pred_check
    _
  $region7: #{dscnet_forward.7} parent=0 // pred_check_branch
    %11 = sbr.rel (0) target = $region9
  $region8: #{dscnet_forward.7} parent=0 // pred_region
    _
  $region9: #{dscnet_forward.7} parent=0 // pred_fallthru
    _
  // Predicated region
  $region10: #{dscnet_forward.7} parent=0 // pred_check
    _
  $region11: #{dscnet_forward.7} parent=0 // pred_check_branch
    %13 = sbr.rel (0) target = $region13
  $region12: #{dscnet_forward.7} parent=0 // pred_region
    _
  $region13: #{dscnet_forward.7} parent=0 // pred_fallthru
    _
  %p15 = scmp.eq.s32.totalorder 0, 0
  // Predicated region
  $region14: #{dscnet_forward.7} parent=0 // pred_check
    %p16 = pneg %p15
  $region15: #{dscnet_forward.7} parent=0 // pred_check_branch
    %18 = sbr.rel (%p16) target = $region17
  $region16: #{dscnet_forward.7} parent=0 // pred_region
    %vm19 = vcmask 523264
    %20 = vst.msk [vmem:[#allocation2] sm:$0xff] %vm19, 0.0
    %21 = vst.msk [vmem:[#allocation2 + $0x8] sm:$0xff] %vm19, 0.0
  $region17: #{dscnet_forward.7} parent=0 // pred_fallthru
    _
  %v22 = vld [vmem:[#allocation2] sm:$0xff]
  %v23 = vld [vmem:[#allocation2 + $0x8] sm:$0xff]
  %v24 = vld [vmem:[%s0] sm:$0xf]
  %v25 = vld [vmem:[%s0 + $0x4] sm:$0xf]
  %v26 = vld [vmem:[%s1] sm:$0xf]
  %v27 = vld [vmem:[%s1 + $0x4] sm:$0xf]
  %v28 = vld [vmem:[%s1 + $0x8] sm:$0xf]
  %v29 = vld [vmem:[%s1 + $0xc] sm:$0xf]
  %v32 = vunpack.c.l.b16 %v24
  %v33 = vunpack.c.l.b16 %v25
  %v34 = vpack.c.b16 %v33, %v32
  %v39 = vunpack.c.l.b16 %v26
  %v40 = vunpack.c.l.b16 %v27
  %v41 = vunpack.c.l.b16 %v28
  %v42 = vunpack.c.l.b16 %v29
  %v43 = vpack.c.b16 %v40, %v39
  %v44 = vpack.c.b16 %v42, %v41
  %vm47 = vcmask 261120
  %v49 = vsel %vm47, %v34, 0
  %51 = vmatprep.subr.bf16.mxu0 0
  %52 = vmatpush1.bf16.msra.mxu0 %v43
  %53 = vmatprep.subr.bf16.mxu0 0
  %54 = vmatpush1.bf16.msra.mxu0 %v44
  %55 = vmatprep.subr.bf16.mxu0 0
  %56 = vmatpush1.bf16.msra.mxu0 0
  %57 = vmatprep.subr.bf16.mxu0 0
  %58 = vmatpush1.bf16.msra.mxu0 0
  %59 = vmatprep.subr.bf16.mxu0 0
  %60 = vmatpush1.bf16.msra.mxu0 0
  %61 = vmatprep.subr.bf16.mxu0 0
  %62 = vmatpush1.bf16.msra.mxu0 0
  %63 = vmatprep.subr.bf16.mxu0 0
  %64 = vmatpush1.bf16.msra.mxu0 0
  %65 = vmatprep.subr.bf16.mxu0 0
  %66 = vmatpush1.bf16.msra.mxu0 0
  %67 = vmatprep.subr.bf16.mxu0 0
  %68 = vmatpush1.bf16.msra.mxu0 0
  %69 = vmatprep.subr.bf16.mxu0 0
  %70 = vmatpush1.bf16.msra.mxu0 0
  %71 = vmatprep.subr.bf16.mxu0 0
  %72 = vmatpush1.bf16.msra.mxu0 0
  %73 = vmatprep.subr.bf16.mxu0 0
  %74 = vmatpush1.bf16.msra.mxu0 0
  %75 = vmatprep.subr.bf16.mxu0 0
  %76 = vmatpush1.bf16.msra.mxu0 0
  %77 = vmatprep.subr.bf16.mxu0 0
  %78 = vmatpush1.bf16.msra.mxu0 0
  %79 = vmatprep.subr.bf16.mxu0 0
  %80 = vmatpush1.bf16.msra.mxu0 0
  %81 = vmatprep.subr.bf16.mxu0 0
  %82 = vmatpush1.bf16.msra.mxu0 0
  %83 = vmatprep.mubr.bf16.mxu0 0
  %84 = vmatmul.mubr.bf16.gmra.mrb[0].mxu0 %v49
  %v85 = vpop.f32.mrb[0].mxu0
  %v86 = vadd.f32 0.0, %v85
  %v87 = vpop.f32.mrb[0].mxu0
  %v88 = vpop.f32.mrb[0].mxu0
  %v89 = vadd.f32 0.0, %v88
  %v90 = vpop.f32.mrb[0].mxu0
  %91 = vdwg.mxu0
  %v92 = vadd.f32 %v22, %v86
  %v93 = vadd.f32 %v23, %v89
  %vm94 = vcmask 523264
  %95 = vst.msk [vmem:[#allocation2] sm:$0xff] %vm94, %v92
  %96 = vst.msk [vmem:[#allocation2 + $0x8] sm:$0xff] %vm94, %v93
  // Predicated region
  $region18: #{dscnet_forward.7} parent=0 // pred_check
    %p97 = pneg %p15
  $region19: #{dscnet_forward.7} parent=0 // pred_check_branch
    %99 = sbr.rel (%p97) target = $region21
  $region20: #{dscnet_forward.7} parent=0 // pred_region
    %v100 = vld [vmem:[#allocation2] sm:$0xff]
    %v101 = vld [vmem:[#allocation2 + $0x8] sm:$0xff]
    %v102 = vld [vmem:[%s2] sm:$0xff]
    %v103 = vld [vmem:[%s2 + $0x8] sm:$0xff]
    %105 = vset.pattern.permute.xlu0 0
    %106 = vperm.xlu0 %105, %v102
    %v107 = vpop.permute.xlu0 %106
    %110 = vset.pattern.permute.xlu0 0
    %111 = vperm.xlu0 %110, %v103
    %v112 = vpop.permute.xlu0 %111
    %v114 = vadd.f32 %v100, %v107
    %v115 = vadd.f32 %v101, %v112
    %v116 = vmax.f32 %v114, 0.0
    %v117 = vmax.f32 %v115, 0.0
    %v118 = vpack.c.bf16 %v117, %v116
    %v120 = vunpack.c.l.b16 %v118
    %v121 = vunpack.c.h.b16 %v118
    %v122 = vpack.c.b16 %v120, %v120
    %v123 = vpack.c.b16 %v121, %v121
    %vm126 = vcmask 519168
    %127 = vst.msk [vmem:[%s3] sm:$0xf] %vm126, %v122
    %128 = vst.msk [vmem:[%s3 + $0x4] sm:$0xf] %vm126, %v123
  $region21: #{dscnet_forward.7} parent=0 // pred_fallthru
    _
  // Predicated region
  $region22: #{dscnet_forward.7} parent=0 // pred_check
    _
  $region23: #{dscnet_forward.7} parent=0 // pred_check_branch
    %130 = sbr.rel (0) target = $region25
  $region24: #{dscnet_forward.7} parent=0 // pred_region
    _
  $region25: #{dscnet_forward.7} parent=0 // pred_fallthru
    _
  // Predicated region
  $region26: #{dscnet_forward.7} parent=0 // pred_check
    _
  $region27: #{dscnet_forward.7} parent=0 // pred_check_branch
    %132 = sbr.rel (0) target = $region29
  $region28: #{dscnet_forward.7} parent=0 // pred_region
    _
  $region29: #{dscnet_forward.7} parent=0 // pred_fallthru
    _

// kernel: dscnet_forward.8
$region0: #{dscnet_forward.8}
  #allocation0 [shape = 'u32[]', space=smem, size = 0x4, offset = 0x4, fixed_abs, tag = 'smem constant byte address 0x4 - core index']
  #allocation1 [shape = 'u32[144,128]{1,0:T(1,128)}', space=vmem, size = 0x12000, scoped, tag = 'internal scratch']
  #allocation2 [shape = 'f32[4,128]{1,0:T(4,128)}', space=vmem, size = 0x800, scoped, tag = 'scratch operand']
  %s0 = inlined_call_operand.vmem [shape: bf16[4,16], index: 0, kind: input, shape index: {}]
  %s1 = inlined_call_operand.vmem [shape: bf16[16,256], index: 1, kind: input, shape index: {}]
  %s2 = inlined_call_operand.vmem [shape: f32[4,1], index: 2, kind: input, shape index: {}]
  %s3 = inlined_call_operand.vmem [shape: f32[4,256], index: 3, kind: output, shape index: {}]
  %s4 = sld [smem:[#allocation0]]
  $region94: #{dscnet_forward.8} parent=0
    _
  %s6 = ssub.s32 1, %s4
  %s7 = scalar_select 0, %s6, %s4
  $region1: #{dscnet_forward.8} parent=0
    #allocation3 [shape = 'u8[8192]{0}', space=vmem, size = 0x2000, scoped, tag = 'input window, operand 1']
    loop: start=0, step=1, limit=4
    $region2: #{dscnet_forward.8} parent=1 // loop_pre_header
      _
    $region3: #{dscnet_forward.8} parent=1 // loop_header
      %s9 = sphi 0, %s13
      %p10 = scmp.ge.s32.totalorder %s9, 4
      %s16 = sphi 0, %s28
      %s17 = sphi 0, %s24
      %s18 = sphi 0, %s16
      %s19 = sphi 0, %s17
      %s20 = sphi 0, %s18
      %s21 = sphi 0, %s19
      %s31 = sphi 0, %s33
      %s34 = sphi 0, %s31
      %s35 = sphi 0, %s34
      %s51 = sphi 0, %s35
      %s59 = sphi 0, %s61
      %s62 = sphi 0, %s59
      %s63 = sphi 0, %s62
      %s79 = sphi 0, %s63
      %s83 = sphi 0, %s83
      %s85 = sphi 0, %s83
      %s86 = sphi 0, %s85
      %s100 = sphi 0, %s86
      %s106 = sphi 0, %s108
      %s109 = sphi 0, %s106
      %s110 = sphi 0, %s109
      %s126 = sphi 0, %s110
    $region4: #{dscnet_forward.8} parent=1 // loop_header_branch
      %12 = sbr.rel (%p10) target = $region8
    $region5: #{dscnet_forward.8} parent=1 // loop_body
      %s14 = ssub.s32 %s9, 1
      %s15 = ssub.s32 %s9, 2
      %s22 = sadd.s32 1, %s17
      %p23 = scmp.ge.s32.totalorder %s22, 1
      %s24 = scalar_select %p23, 0, %s22
      %s25 = sadd.s32 1, %s16
      %s26 = scalar_select %p23, %s25, %s16
      %p27 = scmp.ge.s32.totalorder %s26, 2
      %s28 = scalar_select %p27, 0, %s26
      %s29 = ssub.s32 %s17, %s24
      %p30 = scmp.eq.s32.totalorder %s29, 0
      %s32 = sadd.s32 %s31, 1
      %s33 = scalar_select %p30, %s31, %s32
      %p36 = pneg %p30
      %p37 = scmp.eq.s32.totalorder %s9, 1
      %p38 = por %p36, %p37
      %p39 = scmp.ne.s32.totalorder %s31, %s34
      %p40 = scmp.eq.s32.totalorder %s9, 0
      %p41 = por %p39, %p40
      %p42 = scmp.ne.s32.totalorder %s31, %s34
      %p43 = scmp.eq.s32.totalorder %s14, 1
      %p44 = por %p42, %p43
      %p45 = scmp.ne.s32.totalorder %s34, %s35
      %p46 = scmp.eq.s32.totalorder %s14, 0
      %p47 = por %p45, %p46
      %p48 = scmp.ne.s32.totalorder %s34, %s35
      %p49 = scmp.eq.s32.totalorder %s15, 1
      %p50 = por %p48, %p49
      %p52 = scmp.ne.s32.totalorder %s35, %s51
      %p53 = scmp.eq.s32.totalorder %s15, 0
      %p54 = por %p52, %p53
      %s55 = ssub.s32 %s17, %s24
      %s56 = ssub.s32 %s16, %s28
      %s57 = sor.u32 %s55, %s56
      %p58 = scmp.eq.s32.totalorder %s57, 0
      %s60 = sadd.s32 %s59, 1
      %s61 = scalar_select %p58, %s59, %s60
      %p64 = pneg %p58
      %p65 = scmp.eq.s32.totalorder %s9, 1
      %p66 = por %p64, %p65
      %p67 = scmp.ne.s32.totalorder %s59, %s62
      %p68 = scmp.eq.s32.totalorder %s9, 0
      %p69 = por %p67, %p68
      %p70 = scmp.ne.s32.totalorder %s59, %s62
      %p71 = scmp.eq.s32.totalorder %s14, 1
      %p72 = por %p70, %p71
      %p73 = scmp.ne.s32.totalorder %s62, %s63
      %p74 = scmp.eq.s32.totalorder %s14, 0
      %p75 = por %p73, %p74
      %p76 = scmp.ne.s32.totalorder %s62, %s63
      %p77 = scmp.eq.s32.totalorder %s15, 1
      %p78 = por %p76, %p77
      %p80 = scmp.ne.s32.totalorder %s63, %s79
      %p81 = scmp.eq.s32.totalorder %s15, 0
      %p82 = por %p80, %p81
      %s84 = sadd.s32 %s83, 1
      %p87 = scmp.eq.s32.totalorder %s9, 1
      %p88 = scmp.ne.s32.totalorder %s83, %s85
      %p89 = scmp.eq.s32.totalorder %s9, 0
      %p90 = por %p88, %p89
      %p91 = scmp.ne.s32.totalorder %s83, %s85
      %p92 = scmp.eq.s32.totalorder %s14, 1
      %p93 = por %p91, %p92
      %p94 = scmp.ne.s32.totalorder %s85, %s86
      %p95 = scmp.eq.s32.totalorder %s14, 0
      %p96 = por %p94, %p95
      %p97 = scmp.ne.s32.totalorder %s85, %s86
      %p98 = scmp.eq.s32.totalorder %s15, 1
      %p99 = por %p97, %p98
      %p101 = scmp.ne.s32.totalorder %s86, %s100
      %p102 = scmp.eq.s32.totalorder %s15, 0
      %p103 = por %p101, %p102
      %s104 = ssub.s32 %s16, %s28
      %p105 = scmp.eq.s32.totalorder %s104, 0
      %s107 = sadd.s32 %s106, 1
      %s108 = scalar_select %p105, %s106, %s107
      %p111 = pneg %p105
      %p112 = scmp.eq.s32.totalorder %s9, 1
      %p113 = por %p111, %p112
      %p114 = scmp.ne.s32.totalorder %s106, %s109
      %p115 = scmp.eq.s32.totalorder %s9, 0
      %p116 = por %p114, %p115
      %p117 = scmp.ne.s32.totalorder %s106, %s109
      %p118 = scmp.eq.s32.totalorder %s14, 1
      %p119 = por %p117, %p118
      %p120 = scmp.ne.s32.totalorder %s109, %s110
      %p121 = scmp.eq.s32.totalorder %s14, 0
      %p122 = por %p120, %p121
      %p123 = scmp.ne.s32.totalorder %s109, %s110
      %p124 = scmp.eq.s32.totalorder %s15, 1
      %p125 = por %p123, %p124
      %p127 = scmp.ne.s32.totalorder %s110, %s126
      %p128 = scmp.eq.s32.totalorder %s15, 0
      %p129 = por %p127, %p128
      %p130 = scmp.le.s32.totalorder 1, %s9
      %p131 = scmp.lt.s32.totalorder %s9, 3
      %p132 = pnand %p130, %p131
      %p133 = pneg %p132
      // Predicated region
      $region9: #{dscnet_forward.8} parent=5 // pred_check
        _
      $region10: #{dscnet_forward.8} parent=5 // pred_check_branch
        %135 = sbr.rel (%p132) target = $region12
      $region11: #{dscnet_forward.8} parent=5 // pred_region
        %s136 = ssub.s32 %s9, 1
        // Predicated region
        $region13: #{dscnet_forward.8} parent=11 // pred_check
          %p137 = pneg %p47
        $region14: #{dscnet_forward.8} parent=11 // pred_check_branch
          %139 = sbr.rel (%p137) target = $region16
        $region15: #{dscnet_forward.8} parent=11 // pred_region
          %p140 = scmp.lt.s32.totalorder %s19, 0
          %s141 = scalar_select %p140, %s19, 0
          %s142 = smul.addr %s141, 2
          %s143 = scalar_lea.vmem %s0, %s142
        $region16: #{dscnet_forward.8} parent=11 // pred_fallthru
          _
        // Predicated region
        $region17: #{dscnet_forward.8} parent=11 // pred_check
          %p144 = pneg %p96
        $region18: #{dscnet_forward.8} parent=11 // pred_check_branch
          %146 = sbr.rel (%p144) target = $region20
        $region19: #{dscnet_forward.8} parent=11 // pred_region
          _
        $region20: #{dscnet_forward.8} parent=11 // pred_fallthru
          _
      $region12: #{dscnet_forward.8} parent=5 // pred_fallthru
        _
      %p147 = scmp.lt.s32.totalorder %s9, 2
      // Predicated region
      $region21: #{dscnet_forward.8} parent=5 // pred_check
        %p148 = pneg %p147
      $region22: #{dscnet_forward.8} parent=5 // pred_check_branch
        %150 = sbr.rel (%p148) target = $region24
      $region23: #{dscnet_forward.8} parent=5 // pred_region
        // Predicated region
        $region25: #{dscnet_forward.8} parent=23 // pred_check
          %p151 = pneg %p69
        $region26: #{dscnet_forward.8} parent=23 // pred_check_branch
          %153 = sbr.rel (%p151) target = $region28
        $region27: #{dscnet_forward.8} parent=23 // pred_region
          %s154 = sand.u32 %s59, 1
          %s155 = sand.u32 %s59, 1
          %s156 = smul.addr %s155, 8
          %s157 = scalar_lea.vmem [#allocation3], %s156
          %s158 = smul.u32 2, %s17
          %s159 = smul.addr %s158, 2
          %s160 = sadd.s32 %s16, %s159
          %s161 = smul.addr %s160, 4
          %s162 = scalar_lea.vmem %s1, %s161
          // Predicated region
          $region29: #{dscnet_forward.8} parent=27 // pred_check
            _
          $region30: #{dscnet_forward.8} parent=27 // pred_check_branch
            %164 = sbr.rel (0) target = $region32
          $region31: #{dscnet_forward.8} parent=27 // pred_region
            // Predicated region
            $region33: #{dscnet_forward.8} parent=31 // pred_check
              _
            $region34: #{dscnet_forward.8} parent=31 // pred_check_branch
              %166 = sbr.rel target = $region36
            $region35: #{dscnet_forward.8} parent=31 // pred_region
              // Predicated region
              $region48: #{dscnet_forward.8} parent=35 // pred_check
                _
              $region49: #{dscnet_forward.8} parent=35 // pred_check_branch
                %183 = sbr.rel (0) target = $region51
              $region50: #{dscnet_forward.8} parent=35 // pred_region
                loop: start=0, step=1, limit=1
                $region52: #{dscnet_forward.8} parent=50 // loop_pre_header
                  _
                $region53: #{dscnet_forward.8} parent=50 // loop_header
                  %s185 = sphi 0, %s189
                  %p186 = scmp.ge.s32.totalorder %s185, 1
                  %s190 = sphi %s162, %s162
                  %s191 = sphi %s157, %s157
                $region54: #{dscnet_forward.8} parent=50 // loop_header_branch
                  %188 = sbr.rel (%p186) target = $region58
                $region55: #{dscnet_forward.8} parent=50 // loop_body
                  _
                $region56: #{dscnet_forward.8} parent=50 // loop_footer
                  %s189 = sadd.s32 1, %s185
                $region57: #{dscnet_forward.8} parent=50 // loop_footer_branch
                  %184 = sbr.rel target = $region53
                $region58: #{dscnet_forward.8} parent=50 // loop_exit
                  _
                loop: start=0, step=1, limit=1
                $region59: #{dscnet_forward.8} parent=50 // loop_pre_header
                  _
                $region60: #{dscnet_forward.8} parent=50 // loop_header
                  %s194 = sphi 0, %s198
                  %p195 = scmp.ge.s32.totalorder %s194, 1
                  %s199 = sphi %s162, %s162
                  %s200 = sphi %s157, %s157
                $region61: #{dscnet_forward.8} parent=50 // loop_header_branch
                  %197 = sbr.rel (%p195) target = $region65
                $region62: #{dscnet_forward.8} parent=50 // loop_body
                  %v201 = vld [vmem:[%s199] sm:$0xf]
                  %202 = vst [vmem:[%s200] sm:$0xf] %v201
                  %v203 = vld [vmem:[%s199 + $0x8] sm:$0xf]
                  %204 = vst [vmem:[%s200 + $0x4] sm:$0xf] %v203
                $region63: #{dscnet_forward.8} parent=50 // loop_footer
                  %s198 = sadd.s32 1, %s194
                $region64: #{dscnet_forward.8} parent=50 // loop_footer_branch
                  %193 = sbr.rel target = $region60
                $region65: #{dscnet_forward.8} parent=50 // loop_exit
                  _
              $region51: #{dscnet_forward.8} parent=35 // pred_fallthru
                _
            $region36: #{dscnet_forward.8} parent=31 // pred_fallthru
              _
            // Predicated region
            $region37: #{dscnet_forward.8} parent=31 // pred_check
              _
            $region38: #{dscnet_forward.8} parent=31 // pred_check_branch
              %168 = sbr.rel (0) target = $region40
            $region39: #{dscnet_forward.8} parent=31 // pred_region
              loop: start=0, step=1, limit=1
              $region41: #{dscnet_forward.8} parent=39 // loop_pre_header
                _
              $region42: #{dscnet_forward.8} parent=39 // loop_header
                %s171 = sphi 0, %s175
                %p172 = scmp.ge.s32.totalorder %s171, 1
                %s176 = sphi %s162, %s162
                %s177 = sphi %s157, %s157
              $region43: #{dscnet_forward.8} parent=39 // loop_header_branch
                %174 = sbr.rel (%p172) target = $region47
              $region44: #{dscnet_forward.8} parent=39 // loop_body
                %v178 = vld [vmem:[%s176] sm:$0xf]
                %179 = vst [vmem:[%s177] sm:$0xf] %v178
                %v180 = vld [vmem:[%s176 + $0x8] sm:$0xf]
                %181 = vst [vmem:[%s177 + $0x4] sm:$0xf] %v180
              $region45: #{dscnet_forward.8} parent=39 // loop_footer
                %s175 = sadd.s32 1, %s171
              $region46: #{dscnet_forward.8} parent=39 // loop_footer_branch
                %170 = sbr.rel target = $region42
              $region47: #{dscnet_forward.8} parent=39 // loop_exit
                _
            $region40: #{dscnet_forward.8} parent=31 // pred_fallthru
              _
          $region32: #{dscnet_forward.8} parent=27 // pred_fallthru
            _
          %205 = vnop
        $region28: #{dscnet_forward.8} parent=23 // pred_fallthru
          _
      $region24: #{dscnet_forward.8} parent=5 // pred_fallthru
        _
      %p206 = scmp.le.s32.totalorder 1, %s9
      %p207 = scmp.lt.s32.totalorder %s9, 3
      %p208 = pnand %p206, %p207
      %p209 = pneg %p208
      // Predicated region
      $region66: #{dscnet_forward.8} parent=5 // pred_check
        _
      $region67: #{dscnet_forward.8} parent=5 // pred_check_branch
        %211 = sbr.rel (%p208) target = $region69
      $region68: #{dscnet_forward.8} parent=5 // pred_region
        %s212 = ssub.s32 %s9, 1
        %s213 = sand.u32 %s62, 1
        %s214 = sand.u32 %s62, 1
        %s215 = smul.addr %s214, 8
        %s216 = scalar_lea.vmem [#allocation3], %s215
        // Predicated region
        $region70: #{dscnet_forward.8} parent=68 // pred_check
          %p217 = pneg %p75
        $region71: #{dscnet_forward.8} parent=68 // pred_check_branch
          %219 = sbr.rel (%p217) target = $region73
        $region72: #{dscnet_forward.8} parent=68 // pred_region
          _
        $region73: #{dscnet_forward.8} parent=68 // pred_fallthru
          _
        %p220 = scmp.lt.s32.totalorder %s19, 0
        %s221 = scalar_select %p220, %s19, 0
        %s222 = smul.addr %s221, 2
        %s223 = scalar_lea.vmem %s0, %s222
        %p224 = pneg %p47
        %p225 = pneg %p44
        %s226 = sand.u32 %s62, 1
        %s227 = sand.u32 %s62, 1
        %s228 = smul.addr %s227, 8
        %s229 = scalar_lea.vmem [#allocation3], %s228
        %p230 = pneg %p75
        %p231 = pneg %p72
        %p232 = pneg %p96
        %p233 = pneg %p93
        %p234 = pneg %p122
        %p235 = pneg %p119
        %p236 = scmp.lt.s32.totalorder %s18, 1
        %s237 = scalar_select %p236, %s18, 1
        %s238 = smul.addr %s237, 4
        %s239 = scalar_lea.vmem %s3, %s238
        %p240 = scmp.lt.s32.totalorder %s19, 0
        %s241 = scalar_select %p240, %s19, 0
        %s242 = smul.addr %s241, 2
        %s243 = scalar_lea.vmem %s0, %s242
        %s244 = smul.u32 2, %s19
        %p245 = scmp.lt.s32.totalorder %s18, 1
        %s246 = scalar_select %p245, %s18, 1
        %s247 = smul.addr %s246, 4
        %s248 = scalar_lea.vmem %s3, %s247
        %p250 = scmp.eq.s32.totalorder %s19, 0
        // Predicated region
        $region74: #{dscnet_forward.8} parent=68 // pred_check
          %p251 = pneg %p250
        $region75: #{dscnet_forward.8} parent=68 // pred_check_branch
          %253 = sbr.rel (%p251) target = $region77
        $region76: #{dscnet_forward.8} parent=68 // pred_region
          %254 = vst [vmem:[#allocation2] sm:$0xf] 0.0
        $region77: #{dscnet_forward.8} parent=68 // pred_fallthru
          _
        %v255 = vld [vmem:[#allocation2] sm:$0xf]
        %v256 = vld [vmem:[%s243] sm:$0x3]
        %v257 = vld [vmem:[%s216] sm:$0xf]
        %v258 = vld [vmem:[%s216 + $0x4] sm:$0xf]
        %v261 = vunpack.c.l.b16 %v257
        %v262 = vunpack.c.l.b16 %v258
        %v263 = vpack.c.b16 %v262, %v261
        %vm265 = vcmask 130048
        %v267 = vsel %vm265, %v256, 0
        %269 = vmatprep.subr.bf16.mxu0 0
        %270 = vmatpush1.bf16.msra.mxu0 %v263
        %271 = vmatprep.subr.bf16.mxu0 0
        %272 = vmatpush1.bf16.msra.mxu0 0
        %273 = vmatprep.subr.bf16.mxu0 0
        %274 = vmatpush1.bf16.msra.mxu0 0
        %275 = vmatprep.subr.bf16.mxu0 0
        %276 = vmatpush1.bf16.msra.mxu0 0
        %277 = vmatprep.subr.bf16.mxu0 0
        %278 = vmatpush1.bf16.msra.mxu0 0
        %279 = vmatprep.subr.bf16.mxu0 0
        %280 = vmatpush1.bf16.msra.mxu0 0
        %281 = vmatprep.subr.bf16.mxu0 0
        %282 = vmatpush1.bf16.msra.mxu0 0
        %283 = vmatprep.subr.bf16.mxu0 0
        %284 = vmatpush1.bf16.msra.mxu0 0
        %285 = vmatprep.subr.bf16.mxu0 0
        %286 = vmatpush1.bf16.msra.mxu0 0
        %287 = vmatprep.subr.bf16.mxu0 0
        %288 = vmatpush1.bf16.msra.mxu0 0
        %289 = vmatprep.subr.bf16.mxu0 0
        %290 = vmatpush1.bf16.msra.mxu0 0
        %291 = vmatprep.subr.bf16.mxu0 0
        %292 = vmatpush1.bf16.msra.mxu0 0
        %293 = vmatprep.subr.bf16.mxu0 0
        %294 = vmatpush1.bf16.msra.mxu0 0
        %295 = vmatprep.subr.bf16.mxu0 0
        %296 = vmatpush1.bf16.msra.mxu0 0
        %297 = vmatprep.subr.bf16.mxu0 0
        %298 = vmatpush1.bf16.msra.mxu0 0
        %299 = vmatprep.subr.bf16.mxu0 0
        %300 = vmatpush1.bf16.msra.mxu0 0
        %301 = vmatprep.mubr.bf16.mxu0 0
        %302 = vmatmul.mubr.bf16.gmra.mrb[0].mxu0 %v267
        %v303 = vpop.f32.mrb[0].mxu0
        %v304 = vadd.f32 0.0, %v303
        %v305 = vpop.f32.mrb[0].mxu0
        %v306 = vpop.f32.mrb[0].mxu0
        %v307 = vpop.f32.mrb[0].mxu0
        %308 = vdwg.mxu0
        %v309 = vadd.f32 %v255, %v304
        %310 = vst [vmem:[#allocation2] sm:$0xf] %v309
        // Predicated region
        $region78: #{dscnet_forward.8} parent=68 // pred_check
          %p311 = pneg %p250
        $region79: #{dscnet_forward.8} parent=68 // pred_check_branch
          %313 = sbr.rel (%p311) target = $region81
        $region80: #{dscnet_forward.8} parent=68 // pred_region
          %v314 = vld [vmem:[#allocation2] sm:$0xf]
          %v315 = vld [vmem:[%s2] sm:$0xf]
          %317 = vset.pattern.permute.xlu0 0
          %318 = vperm.xlu0 %317, %v315
          %v319 = vpop.permute.xlu0 %318
          %v321 = vadd.f32 %v314, %v319
          %v322 = vmax.f32 %v321, 0.0
          %323 = vst [vmem:[%s248] sm:$0xf] %v322
        $region81: #{dscnet_forward.8} parent=68 // pred_fallthru
          _
        %p324 = scmp.lt.s32.totalorder %s18, 1
        %s325 = scalar_select %p324, %s18, 1
        %s326 = smul.addr %s325, 4
        %s327 = scalar_lea.vmem %s3, %s326
        // Predicated region
        $region82: #{dscnet_forward.8} parent=68 // pred_check
          %p328 = pneg %p119
        $region83: #{dscnet_forward.8} parent=68 // pred_check_branch
          %330 = sbr.rel (%p328) target = $region85
        $region84: #{dscnet_forward.8} parent=68 // pred_region
          _
        $region85: #{dscnet_forward.8} parent=68 // pred_fallthru
          _
      $region69: #{dscnet_forward.8} parent=5 // pred_fallthru
        _
      %p331 = scmp.le.s32.totalorder 2, %s9
      // Predicated region
      $region86: #{dscnet_forward.8} parent=5 // pred_check
        %p332 = pneg %p331
      $region87: #{dscnet_forward.8} parent=5 // pred_check_branch
        %334 = sbr.rel (%p332) target = $region89
      $region88: #{dscnet_forward.8} parent=5 // pred_region
        %s335 = ssub.s32 %s9, 2
        // Predicated region
        $region90: #{dscnet_forward.8} parent=88 // pred_check
          %p336 = pneg %p125
        $region91: #{dscnet_forward.8} parent=88 // pred_check_branch
          %338 = sbr.rel (%p336) target = $region93
        $region92: #{dscnet_forward.8} parent=88 // pred_region
          %p339 = scmp.lt.s32.totalorder %s20, 1
          %s340 = scalar_select %p339, %s20, 1
          %s341 = smul.addr %s340, 4
          %s342 = scalar_lea.vmem %s3, %s341
        $region93: #{dscnet_forward.8} parent=88 // pred_fallthru
          _
      $region89: #{dscnet_forward.8} parent=5 // pred_fallthru
        _
    $region6: #{dscnet_forward.8} parent=1 // loop_footer
      %s13 = sadd.s32 1, %s9
    $region7: #{dscnet_forward.8} parent=1 // loop_footer_branch
      %8 = sbr.rel target = $region3
    $region8: #{dscnet_forward.8} parent=1 // loop_exit
      _

// kernel: dscnet_forward.9
$region0: #{dscnet_forward.9}
  #allocation0 [shape = 'u32[]', space=smem, size = 0x4, offset = 0x4, fixed_abs, tag = 'smem constant byte address 0x4 - core index']
  #allocation1 [shape = 'u32[144,128]{1,0:T(1,128)}', space=vmem, size = 0x12000, scoped, tag = 'internal scratch']
  %s0 = inlined_call_operand.vmem [shape: bf16[2,2,128], index: 0, kind: input, shape index: {}]
  %s1 = inlined_call_operand.vmem [shape: bf16[2,128,256], index: 1, kind: input, shape index: {}]
  %s2 = inlined_call_operand.vmem [shape: f32[2,1,256], index: 2, kind: input, shape index: {}]
  %s3 = inlined_call_operand.vmem [shape: bf16[2,256,128], index: 3, kind: input, shape index: {}]
  %s4 = inlined_call_operand.vmem [shape: f32[2,1,128], index: 4, kind: input, shape index: {}]
  %s5 = inlined_call_operand.vmem [shape: f32[2,2,128], index: 5, kind: output, shape index: {}]
  %s6 = sld [smem:[#allocation0]]
  $region53: #{dscnet_forward.9} parent=0
    _
  %s8 = ssub.s32 1, %s6
  %s9 = scalar_select 0, %s8, %s6
  loop: start=0, step=1, limit=4
  $region2: #{dscnet_forward.9} parent=0 // loop_pre_header
    _
  $region3: #{dscnet_forward.9} parent=0 // loop_header
    %s11 = sphi 0, %s15
    %p12 = scmp.ge.s32.totalorder %s11, 4
    %s21 = sphi 0, %s23
    %s24 = sphi 0, %s21
    %s25 = sphi 0, %s24
    %s41 = sphi 0, %s25
    %s47 = sphi 0, %s49
    %s50 = sphi 0, %s47
    %s51 = sphi 0, %s50
    %s67 = sphi 0, %s51
    %s73 = sphi 0, %s75
    %s76 = sphi 0, %s73
    %s77 = sphi 0, %s76
    %s93 = sphi 0, %s77
    %s99 = sphi 0, %s101
    %s102 = sphi 0, %s99
    %s103 = sphi 0, %s102
    %s119 = sphi 0, %s103
    %s125 = sphi 0, %s127
    %s128 = sphi 0, %s125
    %s129 = sphi 0, %s128
    %s145 = sphi 0, %s129
    %s151 = sphi 0, %s153
    %s154 = sphi 0, %s151
    %s155 = sphi 0, %s154
    %s171 = sphi 0, %s155
  $region4: #{dscnet_forward.9} parent=0 // loop_header_branch
    %14 = sbr.rel (%p12) target = $region8
  $region5: #{dscnet_forward.9} parent=0 // loop_body
    %s16 = ssub.s32 %s11, 1
    %s17 = ssub.s32 %s11, 2
    %s18 = sadd.s32 %s11, 1
    %s19 = ssub.s32 %s11, %s18
    %p20 = scmp.eq.s32.totalorder %s19, 0
    %s22 = sadd.s32 %s21, 1
    %s23 = scalar_select %p20, %s21, %s22
    %p26 = pneg %p20
    %p27 = scmp.eq.s32.totalorder %s11, 1
    %p28 = por %p26, %p27
    %p29 = scmp.ne.s32.totalorder %s21, %s24
    %p30 = scmp.eq.s32.totalorder %s11, 0
    %p31 = por %p29, %p30
    %p32 = scmp.ne.s32.totalorder %s21, %s24
    %p33 = scmp.eq.s32.totalorder %s16, 1
    %p34 = por %p32, %p33
    %p35 = scmp.ne.s32.totalorder %s24, %s25
    %p36 = scmp.eq.s32.totalorder %s16, 0
    %p37 = por %p35, %p36
    %p38 = scmp.ne.s32.totalorder %s24, %s25
    %p39 = scmp.eq.s32.totalorder %s17, 1
    %p40 = por %p38, %p39
    %p42 = scmp.ne.s32.totalorder %s25, %s41
    %p43 = scmp.eq.s32.totalorder %s17, 0
    %p44 = por %p42, %p43
    %s45 = ssub.s32 %s11, %s18
    %p46 = scmp.eq.s32.totalorder %s45, 0
    %s48 = sadd.s32 %s47, 1
    %s49 = scalar_select %p46, %s47, %s48
    %p52 = pneg %p46
    %p53 = scmp.eq.s32.totalorder %s11, 1
    %p54 = por %p52, %p53
    %p55 = scmp.ne.s32.totalorder %s47, %s50
    %p56 = scmp.eq.s32.totalorder %s11, 0
    %p57 = por %p55, %p56
    %p58 = scmp.ne.s32.totalorder %s47, %s50
    %p59 = scmp.eq.s32.totalorder %s16, 1
    %p60 = por %p58, %p59
    %p61 = scmp.ne.s32.totalorder %s50, %s51
    %p62 = scmp.eq.s32.totalorder %s16, 0
    %p63 = por %p61, %p62
    %p64 = scmp.ne.s32.totalorder %s50, %s51
    %p65 = scmp.eq.s32.totalorder %s17, 1
    %p66 = por %p64, %p65
    %p68 = scmp.ne.s32.totalorder %s51, %s67
    %p69 = scmp.eq.s32.totalorder %s17, 0
    %p70 = por %p68, %p69
    %s71 = ssub.s32 %s11, %s18
    %p72 = scmp.eq.s32.totalorder %s71, 0
    %s74 = sadd.s32 %s73, 1
    %s75 = scalar_select %p72, %s73, %s74
    %p78 = pneg %p72
    %p79 = scmp.eq.s32.totalorder %s11, 1
    %p80 = por %p78, %p79
    %p81 = scmp.ne.s32.totalorder %s73, %s76
    %p82 = scmp.eq.s32.totalorder %s11, 0
    %p83 = por %p81, %p82
    %p84 = scmp.ne.s32.totalorder %s73, %s76
    %p85 = scmp.eq.s32.totalorder %s16, 1
    %p86 = por %p84, %p85
    %p87 = scmp.ne.s32.totalorder %s76, %s77
    %p88 = scmp.eq.s32.totalorder %s16, 0
    %p89 = por %p87, %p88
    %p90 = scmp.ne.s32.totalorder %s76, %s77
    %p91 = scmp.eq.s32.totalorder %s17, 1
    %p92 = por %p90, %p91
    %p94 = scmp.ne.s32.totalorder %s77, %s93
    %p95 = scmp.eq.s32.totalorder %s17, 0
    %p96 = por %p94, %p95
    %s97 = ssub.s32 %s11, %s18
    %p98 = scmp.eq.s32.totalorder %s97, 0
    %s100 = sadd.s32 %s99, 1
    %s101 = scalar_select %p98, %s99, %s100
    %p104 = pneg %p98
    %p105 = scmp.eq.s32.totalorder %s11, 1
    %p106 = por %p104, %p105
    %p107 = scmp.ne.s32.totalorder %s99, %s102
    %p108 = scmp.eq.s32.totalorder %s11, 0
    %p109 = por %p107, %p108
    %p110 = scmp.ne.s32.totalorder %s99, %s102
    %p111 = scmp.eq.s32.totalorder %s16, 1
    %p112 = por %p110, %p111
    %p113 = scmp.ne.s32.totalorder %s102, %s103
    %p114 = scmp.eq.s32.totalorder %s16, 0
    %p115 = por %p113, %p114
    %p116 = scmp.ne.s32.totalorder %s102, %s103
    %p117 = scmp.eq.s32.totalorder %s17, 1
    %p118 = por %p116, %p117
    %p120 = scmp.ne.s32.totalorder %s103, %s119
    %p121 = scmp.eq.s32.totalorder %s17, 0
    %p122 = por %p120, %p121
    %s123 = ssub.s32 %s11, %s18
    %p124 = scmp.eq.s32.totalorder %s123, 0
    %s126 = sadd.s32 %s125, 1
    %s127 = scalar_select %p124, %s125, %s126
    %p130 = pneg %p124
    %p131 = scmp.eq.s32.totalorder %s11, 1
    %p132 = por %p130, %p131
    %p133 = scmp.ne.s32.totalorder %s125, %s128
    %p134 = scmp.eq.s32.totalorder %s11, 0
    %p135 = por %p133, %p134
    %p136 = scmp.ne.s32.totalorder %s125, %s128
    %p137 = scmp.eq.s32.totalorder %s16, 1
    %p138 = por %p136, %p137
    %p139 = scmp.ne.s32.totalorder %s128, %s129
    %p140 = scmp.eq.s32.totalorder %s16, 0
    %p141 = por %p139, %p140
    %p142 = scmp.ne.s32.totalorder %s128, %s129
    %p143 = scmp.eq.s32.totalorder %s17, 1
    %p144 = por %p142, %p143
    %p146 = scmp.ne.s32.totalorder %s129, %s145
    %p147 = scmp.eq.s32.totalorder %s17, 0
    %p148 = por %p146, %p147
    %s149 = ssub.s32 %s11, %s18
    %p150 = scmp.eq.s32.totalorder %s149, 0
    %s152 = sadd.s32 %s151, 1
    %s153 = scalar_select %p150, %s151, %s152
    %p156 = pneg %p150
    %p157 = scmp.eq.s32.totalorder %s11, 1
    %p158 = por %p156, %p157
    %p159 = scmp.ne.s32.totalorder %s151, %s154
    %p160 = scmp.eq.s32.totalorder %s11, 0
    %p161 = por %p159, %p160
    %p162 = scmp.ne.s32.totalorder %s151, %s154
    %p163 = scmp.eq.s32.totalorder %s16, 1
    %p164 = por %p162, %p163
    %p165 = scmp.ne.s32.totalorder %s154, %s155
    %p166 = scmp.eq.s32.totalorder %s16, 0
    %p167 = por %p165, %p166
    %p168 = scmp.ne.s32.totalorder %s154, %s155
    %p169 = scmp.eq.s32.totalorder %s17, 1
    %p170 = por %p168, %p169
    %p172 = scmp.ne.s32.totalorder %s155, %s171
    %p173 = scmp.eq.s32.totalorder %s17, 0
    %p174 = por %p172, %p173
    %p175 = scmp.le.s32.totalorder 1, %s11
    %p176 = scmp.lt.s32.totalorder %s11, 3
    %p177 = pnand %p175, %p176
    %p178 = pneg %p177
    // Predicated region
    $region9: #{dscnet_forward.9} parent=5 // pred_check
      _
    $region10: #{dscnet_forward.9} parent=5 // pred_check_branch
      %180 = sbr.rel (%p177) target = $region12
    $region11: #{dscnet_forward.9} parent=5 // pred_region
      %s181 = ssub.s32 %s11, 1
    $region12: #{dscnet_forward.9} parent=5 // pred_fallthru
      _
    %p182 = scmp.lt.s32.totalorder %s11, 2
    // Predicated region
    $region13: #{dscnet_forward.9} parent=5 // pred_check
      %p183 = pneg %p182
    $region14: #{dscnet_forward.9} parent=5 // pred_check_branch
      %185 = sbr.rel (%p183) target = $region16
    $region15: #{dscnet_forward.9} parent=5 // pred_region
      // Predicated region
      $region17: #{dscnet_forward.9} parent=15 // pred_check
        %p186 = pneg %p31
      $region18: #{dscnet_forward.9} parent=15 // pred_check_branch
        %188 = sbr.rel (%p186) target = $region20
      $region19: #{dscnet_forward.9} parent=15 // pred_region
        %p189 = scmp.lt.s32.totalorder %s11, 1
        %s190 = scalar_select %p189, %s11, 1
        %s191 = scalar_lea.vmem %s0, %s190
      $region20: #{dscnet_forward.9} parent=15 // pred_fallthru
        _
      // Predicated region
      $region21: #{dscnet_forward.9} parent=15 // pred_check
        %p192 = pneg %p57
      $region22: #{dscnet_forward.9} parent=15 // pred_check_branch
        %194 = sbr.rel (%p192) target = $region24
      $region23: #{dscnet_forward.9} parent=15 // pred_region
        %p195 = scmp.lt.s32.totalorder %s11, 1
        %s196 = scalar_select %p195, %s11, 1
        %s197 = smul.addr %s196, 32
        %s198 = smul.addr %s197, 4
        %s199 = scalar_lea.vmem %s1, %s198
      $region24: #{dscnet_forward.9} parent=15 // pred_fallthru
        _
      // Predicated region
      $region25: #{dscnet_forward.9} parent=15 // pred_check
        %p200 = pneg %p83
      $region26: #{dscnet_forward.9} parent=15 // pred_check_branch
        %202 = sbr.rel (%p200) target = $region28
      $region27: #{dscnet_forward.9} parent=15 // pred_region
        %p203 = scmp.lt.s32.totalorder %s11, 1
        %s204 = scalar_select %p203, %s11, 1
        %s205 = smul.addr %s204, 2
        %s206 = scalar_lea.vmem %s2, %s205
      $region28: #{dscnet_forward.9} parent=15 // pred_fallthru
        _
      // Predicated region
      $region29: #{dscnet_forward.9} parent=15 // pred_check
        %p207 = pneg %p109
      $region30: #{dscnet_forward.9} parent=15 // pred_check_branch
        %209 = sbr.rel (%p207) target = $region32
      $region31: #{dscnet_forward.9} parent=15 // pred_region
        %p210 = scmp.lt.s32.totalorder %s11, 1
        %s211 = scalar_select %p210, %s11, 1
        %s212 = smul.addr %s211, 32
        %s213 = smul.addr %s212, 4
        %s214 = scalar_lea.vmem %s3, %s213
      $region32: #{dscnet_forward.9} parent=15 // pred_fallthru
        _
      // Predicated region
      $region33: #{dscnet_forward.9} parent=15 // pred_check
        %p215 = pneg %p135
      $region34: #{dscnet_forward.9} parent=15 // pred_check_branch
        %217 = sbr.rel (%p215) target = $region36
      $region35: #{dscnet_forward.9} parent=15 // pred_region
        %p218 = scmp.lt.s32.totalorder %s11, 1
        %s219 = scalar_select %p218, %s11, 1
        %s220 = scalar_lea.vmem %s4, %s219
      $region36: #{dscnet_forward.9} parent=15 // pred_fallthru
        _
    $region16: #{dscnet_forward.9} parent=5 // pred_fallthru
      _
    %p221 = scmp.le.s32.totalorder 1, %s11
    %p222 = scmp.lt.s32.totalorder %s11, 3
    %p223 = pnand %p221, %p222
    %p224 = pneg %p223
    // Predicated region
    $region37: #{dscnet_forward.9} parent=5 // pred_check
      _
    $region38: #{dscnet_forward.9} parent=5 // pred_check_branch
      %226 = sbr.rel (%p223) target = $region40
    $region39: #{dscnet_forward.9} parent=5 // pred_region
      %s227 = ssub.s32 %s11, 1
      %p228 = scmp.lt.s32.totalorder %s16, 1
      %s229 = scalar_select %p228, %s16, 1
      %s230 = scalar_lea.vmem %s0, %s229
      %p231 = pneg %p37
      %p232 = pneg %p34
      %p233 = scmp.lt.s32.totalorder %s16, 1
      %s234 = scalar_select %p233, %s16, 1
      %s235 = smul.addr %s234, 32
      %s236 = smul.addr %s235, 4
      %s237 = scalar_lea.vmem %s1, %s236
      %p238 = pneg %p63
      %p239 = pneg %p60
      %p240 = scmp.lt.s32.totalorder %s16, 1
      %s241 = scalar_select %p240, %s16, 1
      %s242 = smul.addr %s241, 2
      %s243 = scalar_lea.vmem %s2, %s242
      %p244 = pneg %p89
      %p245 = pneg %p86
      %p246 = scmp.lt.s32.totalorder %s16, 1
      %s247 = scalar_select %p246, %s16, 1
      %s248 = smul.addr %s247, 32
      %s249 = smul.addr %s248, 4
      %s250 = scalar_lea.vmem %s3, %s249
      %p251 = pneg %p115
      %p252 = pneg %p112
      %p253 = scmp.lt.s32.totalorder %s16, 1
      %s254 = scalar_select %p253, %s16, 1
      %s255 = scalar_lea.vmem %s4, %s254
      %p256 = pneg %p141
      %p257 = pneg %p138
      %p258 = pneg %p167
      %p259 = pneg %p164
      %p260 = scmp.lt.s32.totalorder %s16, 1
      %s261 = scalar_select %p260, %s16, 1
      %s262 = smul.addr %s261, 2
      %s263 = scalar_lea.vmem %s5, %s262
      %p264 = scmp.lt.s32.totalorder %s16, 1
      %s265 = scalar_select %p264, %s16, 1
      %s266 = scalar_lea.vmem %s0, %s265
      %p267 = scmp.lt.s32.totalorder %s16, 1
      %s268 = scalar_select %p267, %s16, 1
      %s269 = smul.addr %s268, 32
      %s270 = smul.addr %s269, 4
      %s271 = scalar_lea.vmem %s1, %s270
      %p272 = scmp.lt.s32.totalorder %s16, 1
      %s273 = scalar_select %p272, %s16, 1
      %s274 = smul.addr %s273, 2
      %s275 = scalar_lea.vmem %s2, %s274
      %p276 = scmp.lt.s32.totalorder %s16, 1
      %s277 = scalar_select %p276, %s16, 1
      %s278 = smul.addr %s277, 32
      %s279 = smul.addr %s278, 4
      %s280 = scalar_lea.vmem %s3, %s279
      %p281 = scmp.lt.s32.totalorder %s16, 1
      %s282 = scalar_select %p281, %s16, 1
      %s283 = scalar_lea.vmem %s4, %s282
      %p284 = scmp.lt.s32.totalorder %s16, 1
      %s285 = scalar_select %p284, %s16, 1
      %s286 = smul.addr %s285, 2
      %s287 = scalar_lea.vmem %s5, %s286
      %v289 = vld [vmem:[%s266] sm:$0x1]
      %v290 = vld [vmem:[%s271] sm:$0xff]
      %v291 = vld [vmem:[%s271 + $0x8] sm:$0xff]
      %v292 = vld [vmem:[%s271 + $0x10] sm:$0xff]
      %v293 = vld [vmem:[%s271 + $0x18] sm:$0xff]
      %v294 = vld [vmem:[%s271 + $0x20] sm:$0xff]
      %v295 = vld [vmem:[%s271 + $0x28] sm:$0xff]
      %v296 = vld [vmem:[%s271 + $0x30] sm:$0xff]
      %v297 = vld [vmem:[%s271 + $0x38] sm:$0xff]
      %v298 = vld [vmem:[%s271 + $0x40] sm:$0xff]
      %v299 = vld [vmem:[%s271 + $0x48] sm:$0xff]
      %v300 = vld [vmem:[%s271 + $0x50] sm:$0xff]
      %v301 = vld [vmem:[%s271 + $0x58] sm:$0xff]
      %v302 = vld [vmem:[%s271 + $0x60] sm:$0xff]
      %v303 = vld [vmem:[%s271 + $0x68] sm:$0xff]
      %v304 = vld [vmem:[%s271 + $0x70] sm:$0xff]
      %v305 = vld [vmem:[%s271 + $0x78] sm:$0xff]
      %v306 = vld [vmem:[%s275] sm:$0x3]
      %v308 = vlaneseq
      %v309 = vshrl.u32 %v308, 7
      %v310 = vsub.s32 0, %v309
      %v311 = vrot.slane %v306, %v310
      %v312 = vlaneseq
      %v313 = vshrl.u32 %v312, 7
      %v314 = vsub.s32 1, %v313
      %v315 = vrot.slane %v306, %v314
      %v334 = vunpack.c.l.b16 %v290
      %v335 = vunpack.c.h.b16 %v290
      %v336 = vunpack.c.l.b16 %v291
      %v337 = vunpack.c.h.b16 %v291
      %v338 = vunpack.c.l.b16 %v292
      %v339 = vunpack.c.h.b16 %v292
      %v340 = vunpack.c.l.b16 %v293
      %v341 = vunpack.c.h.b16 %v293
      %v342 = vunpack.c.l.b16 %v294
      %v343 = vunpack.c.h.b16 %v294
      %v344 = vunpack.c.l.b16 %v295
      %v345 = vunpack.c.h.b16 %v295
      %v346 = vunpack.c.l.b16 %v296
      %v347 = vunpack.c.h.b16 %v296
      %v348 = vunpack.c.l.b16 %v297
      %v349 = vunpack.c.h.b16 %v297
      %v350 = vunpack.c.l.b16 %v298
      %v351 = vunpack.c.h.b16 %v298
      %v352 = vunpack.c.l.b16 %v299
      %v353 = vunpack.c.h.b16 %v299
      %v354 = vunpack.c.l.b16 %v300
      %v355 = vunpack.c.h.b16 %v300
      %v356 = vunpack.c.l.b16 %v301
      %v357 = vunpack.c.h.b16 %v301
      %v358 = vunpack.c.l.b16 %v302
      %v359 = vunpack.c.h.b16 %v302
      %v360 = vunpack.c.l.b16 %v303
      %v361 = vunpack.c.h.b16 %v303
      %v362 = vunpack.c.l.b16 %v304
      %v363 = vunpack.c.h.b16 %v304
      %v364 = vunpack.c.l.b16 %v305
      %v365 = vunpack.c.h.b16 %v305
      %v366 = vpack.c.b16 %v336, %v334
      %v367 = vpack.c.b16 %v337, %v335
      %v368 = vpack.c.b16 %v340, %v338
      %v369 = vpack.c.b16 %v341, %v339
      %v370 = vpack.c.b16 %v344, %v342
      %v371 = vpack.c.b16 %v345, %v343
      %v372 = vpack.c.b16 %v348, %v346
      %v373 = vpack.c.b16 %v349, %v347
      %v374 = vpack.c.b16 %v352, %v350
      %v375 = vpack.c.b16 %v353, %v351
      %v376 = vpack.c.b16 %v356, %v354
      %v377 = vpack.c.b16 %v357, %v355
      %v378 = vpack.c.b16 %v360, %v358
      %v379 = vpack.c.b16 %v361, %v359
      %v380 = vpack.c.b16 %v364, %v362
      %v381 = vpack.c.b16 %v365, %v363
      %398 = vmatprep.subr.bf16.mxu0 %v367
      %399 = vmatpush1.bf16.msra.mxu0 %v366
      %400 = vmatprep.subr.bf16.mxu0 %v369
      %401 = vmatpush1.bf16.msra.mxu0 %v368
      %402 = vmatprep.subr.bf16.mxu0 %v371
      %403 = vmatpush1.bf16.msra.mxu0 %v370
      %404 = vmatprep.subr.bf16.mxu0 %v373
      %405 = vmatpush1.bf16.msra.mxu0 %v372
      %406 = vmatprep.subr.bf16.mxu0 %v375
      %407 = vmatpush1.bf16.msra.mxu0 %v374
      %408 = vmatprep.subr.bf16.mxu0 %v377
      %409 = vmatpush1.bf16.msra.mxu0 %v376
      %410 = vmatprep.subr.bf16.mxu0 %v379
      %411 = vmatpush1.bf16.msra.mxu0 %v378
      %412 = vmatprep.subr.bf16.mxu0 %v381
      %413 = vmatpush1.bf16.msra.mxu0 %v380
      %414 = vmatprep.subr.bf16.mxu0 0
      %415 = vmatpush1.bf16.msra.mxu0 0
      %416 = vmatprep.subr.bf16.mxu0 0
      %417 = vmatpush1.bf16.msra.mxu0 0
      %418 = vmatprep.subr.bf16.mxu0 0
      %419 = vmatpush1.bf16.msra.mxu0 0
      %420 = vmatprep.subr.bf16.mxu0 0
      %421 = vmatpush1.bf16.msra.mxu0 0
      %422 = vmatprep.subr.bf16.mxu0 0
      %423 = vmatpush1.bf16.msra.mxu0 0
      %424 = vmatprep.subr.bf16.mxu0 0
      %425 = vmatpush1.bf16.msra.mxu0 0
      %426 = vmatprep.subr.bf16.mxu0 0
      %427 = vmatpush1.bf16.msra.mxu0 0
      %428 = vmatprep.subr.bf16.mxu0 0
      %429 = vmatpush1.bf16.msra.mxu0 0
      %430 = vmatprep.mubr.bf16.mxu0 0
      %431 = vmatmul.mubr.bf16.gmra.mrb[0].mxu0 %v289
      %v432 = vpop.f32.mrb[0].mxu0
      %v433 = vadd.f32 %v311, %v432
      %v434 = vpop.f32.mrb[0].mxu0
      %v435 = vadd.f32 %v315, %v434
      %v436 = vpop.f32.mrb[0].mxu0
      %v437 = vpop.f32.mrb[0].mxu0
      %438 = vdwg.mxu0
      %v439 = vmax.f32 %v433, 0.0
      %v440 = vmax.f32 %v435, 0.0
      %v441 = vpack.c.bf16 %v439, %v439
      %v442 = vpack.c.bf16 %v440, %v440
      %v443 = vld [vmem:[%s280] sm:$0xf]
      %v444 = vld [vmem:[%s280 + $0x4] sm:$0xf]
      %v445 = vld [vmem:[%s280 + $0x8] sm:$0xf]
      %v446 = vld [vmem:[%s280 + $0xc] sm:$0xf]
      %v447 = vld [vmem:[%s280 + $0x10] sm:$0xf]
      %v448 = vld [vmem:[%s280 + $0x14] sm:$0xf]
      %v449 = vld [vmem:[%s280 + $0x18] sm:$0xf]
      %v450 = vld [vmem:[%s280 + $0x1c] sm:$0xf]
      %v451 = vld [vmem:[%s280 + $0x20] sm:$0xf]
      %v452 = vld [vmem:[%s280 + $0x24] sm:$0xf]
      %v453 = vld [vmem:[%s280 + $0x28] sm:$0xf]
      %v454 = vld [vmem:[%s280 + $0x2c] sm:$0xf]
      %v455 = vld [vmem:[%s280 + $0x30] sm:$0xf]
      %v456 = vld [vmem:[%s280 + $0x34] sm:$0xf]
      %v457 = vld [vmem:[%s280 + $0x38] sm:$0xf]
      %v458 = vld [vmem:[%s280 + $0x3c] sm:$0xf]
      %v459 = vld [vmem:[%s280 + $0x40] sm:$0xf]
      %v460 = vld [vmem:[%s280 + $0x44] sm:$0xf]
      %v461 = vld [vmem:[%s280 + $0x48] sm:$0xf]
      %v462 = vld [vmem:[%s280 + $0x4c] sm:$0xf]
      %v463 = vld [vmem:[%s280 + $0x50] sm:$0xf]
      %v464 = vld [vmem:[%s280 + $0x54] sm:$0xf]
      %v465 = vld [vmem:[%s280 + $0x58] sm:$0xf]
      %v466 = vld [vmem:[%s280 + $0x5c] sm:$0xf]
      %v467 = vld [vmem:[%s280 + $0x60] sm:$0xf]
      %v468 = vld [vmem:[%s280 + $0x64] sm:$0xf]
      %v469 = vld [vmem:[%s280 + $0x68] sm:$0xf]
      %v470 = vld [vmem:[%s280 + $0x6c] sm:$0xf]
      %v471 = vld [vmem:[%s280 + $0x70] sm:$0xf]
      %v472 = vld [vmem:[%s280 + $0x74] sm:$0xf]
      %v473 = vld [vmem:[%s280 + $0x78] sm:$0xf]
      %v474 = vld [vmem:[%s280 + $0x7c] sm:$0xf]
      %v475 = vld [vmem:[%s283] sm:$0x1]
      %v477 = vlaneseq
      %v478 = vshrl.u32 %v477, 7
      %v479 = vsub.s32 0, %v478
      %v480 = vrot.slane %v475, %v479
      %v514 = vunpack.c.l.b16 %v443
      %v515 = vunpack.c.l.b16 %v444
      %v516 = vunpack.c.l.b16 %v445
      %v517 = vunpack.c.l.b16 %v446
      %v518 = vunpack.c.l.b16 %v447
      %v519 = vunpack.c.l.b16 %v448
      %v520 = vunpack.c.l.b16 %v449
      %v521 = vunpack.c.l.b16 %v450
      %v522 = vunpack.c.l.b16 %v451
      %v523 = vunpack.c.l.b16 %v452
      %v524 = vunpack.c.l.b16 %v453
      %v525 = vunpack.c.l.b16 %v454
      %v526 = vunpack.c.l.b16 %v455
      %v527 = vunpack.c.l.b16 %v456
      %v528 = vunpack.c.l.b16 %v457
      %v529 = vunpack.c.l.b16 %v458
      %v530 = vunpack.c.l.b16 %v459
      %v531 = vunpack.c.l.b16 %v460
      %v532 = vunpack.c.l.b16 %v461
      %v533 = vunpack.c.l.b16 %v462
      %v534 = vunpack.c.l.b16 %v463
      %v535 = vunpack.c.l.b16 %v464
      %v536 = vunpack.c.l.b16 %v465
      %v537 = vunpack.c.l.b16 %v466
      %v538 = vunpack.c.l.b16 %v467
      %v539 = vunpack.c.l.b16 %v468
      %v540 = vunpack.c.l.b16 %v469
      %v541 = vunpack.c.l.b16 %v470
      %v542 = vunpack.c.l.b16 %v471
      %v543 = vunpack.c.l.b16 %v472
      %v544 = vunpack.c.l.b16 %v473
      %v545 = vunpack.c.l.b16 %v474
      %v546 = vpack.c.b16 %v515, %v514
      %v547 = vpack.c.b16 %v517, %v516
      %v548 = vpack.c.b16 %v519, %v518
      %v549 = vpack.c.b16 %v521, %v520
      %v550 = vpack.c.b16 %v523, %v522
      %v551 = vpack.c.b16 %v525, %v524
      %v552 = vpack.c.b16 %v527, %v526
      %v553 = vpack.c.b16 %v529, %v528
      %v554 = vpack.c.b16 %v531, %v530
      %v555 = vpack.c.b16 %v533, %v532
      %v556 = vpack.c.b16 %v535, %v534
      %v557 = vpack.c.b16 %v537, %v536
      %v558 = vpack.c.b16 %v539, %v538
      %v559 = vpack.c.b16 %v541, %v540
      %v560 = vpack.c.b16 %v543, %v542
      %v561 = vpack.c.b16 %v545, %v544
      %578 = vmatprep.subr.bf16.mxu0 0
      %579 = vmatpush1.bf16.msra.mxu0 %v546
      %580 = vmatprep.subr.bf16.mxu0 0
      %581 = vmatpush1.bf16.msra.mxu0 %v547
      %582 = vmatprep.subr.bf16.mxu0 0
      %583 = vmatpush1.bf16.msra.mxu0 %v548
      %584 = vmatprep.subr.bf16.mxu0 0
      %585 = vmatpush1.bf16.msra.mxu0 %v549
      %586 = vmatprep.subr.bf16.mxu0 0
      %587 = vmatpush1.bf16.msra.mxu0 %v550
      %588 = vmatprep.subr.bf16.mxu0 0
      %589 = vmatpush1.bf16.msra.mxu0 %v551
      %590 = vmatprep.subr.bf16.mxu0 0
      %591 = vmatpush1.bf16.msra.mxu0 %v552
      %592 = vmatprep.subr.bf16.mxu0 0
      %593 = vmatpush1.bf16.msra.mxu0 %v553
      %594 = vmatprep.subr.bf16.mxu0 0
      %595 = vmatpush1.bf16.msra.mxu0 %v554
      %596 = vmatprep.subr.bf16.mxu0 0
      %597 = vmatpush1.bf16.msra.mxu0 %v555
      %598 = vmatprep.subr.bf16.mxu0 0
      %599 = vmatpush1.bf16.msra.mxu0 %v556
      %600 = vmatprep.subr.bf16.mxu0 0
      %601 = vmatpush1.bf16.msra.mxu0 %v557
      %602 = vmatprep.subr.bf16.mxu0 0
      %603 = vmatpush1.bf16.msra.mxu0 %v558
      %604 = vmatprep.subr.bf16.mxu0 0
      %605 = vmatpush1.bf16.msra.mxu0 %v559
      %606 = vmatprep.subr.bf16.mxu0 0
      %607 = vmatpush1.bf16.msra.mxu0 %v560
      %608 = vmatprep.subr.bf16.mxu0 0
      %609 = vmatpush1.bf16.msra.mxu0 %v561
      %610 = vmatprep.mubr.bf16.mxu0 %v442
      %611 = vmatmul.mubr.bf16.gmra.mrb[0].mxu0 %v441
      %v612 = vpop.f32.mrb[0].mxu0
      %v613 = vadd.f32 %v480, %v612
      %v614 = vpop.f32.mrb[0].mxu0
      %v615 = vpop.f32.mrb[0].mxu0
      %v616 = vpop.f32.mrb[0].mxu0
      %617 = vdwg.mxu0
      %vm618 = vcmask 1041408
      %v619 = vsel %vm618, %v613, -inf
      %620 = vmax.xlane.f32.xlu0 %v619
      %v621 = vpop.xlane.xlu0 %620
      %v622 = vsub.f32 %v613, %v621
      %v623 = vmul.f32 %v622, 1.442695
      %v624 = vpow.pop %v623
      %v625 = vsel %vm618, %v624, 0.0
      %626 = vadd.xlane.f32.xlu0 %v625
      %v627 = vpop.xlane.xlu0 %626
      %v628 = vrcp.pop %v627
      %v629 = vmul.f32 %v624, %v628
      %630 = vst [vmem:[%s287] sm:$0x3] %v629
      %p631 = scmp.lt.s32.totalorder %s16, 1
      %s632 = scalar_select %p631, %s16, 1
      %s633 = smul.addr %s632, 2
      %s634 = scalar_lea.vmem %s5, %s633
      // Predicated region
      $region41: #{dscnet_forward.9} parent=39 // pred_check
        %p635 = pneg %p164
      $region42: #{dscnet_forward.9} parent=39 // pred_check_branch
        %637 = sbr.rel (%p635) target = $region44
      $region43: #{dscnet_forward.9} parent=39 // pred_region
        _
      $region44: #{dscnet_forward.9} parent=39 // pred_fallthru
        _
    $region40: #{dscnet_forward.9} parent=5 // pred_fallthru
      _
    %p638 = scmp.le.s32.totalorder 2, %s11
    // Predicated region
    $region45: #{dscnet_forward.9} parent=5 // pred_check
      %p639 = pneg %p638
    $region46: #{dscnet_forward.9} parent=5 // pred_check_branch
      %641 = sbr.rel (%p639) target = $region48
    $region47: #{dscnet_forward.9} parent=5 // pred_region
      %s642 = ssub.s32 %s11, 2
      // Predicated region
      $region49: #{dscnet_forward.9} parent=47 // pred_check
        %p643 = pneg %p170
      $region50: #{dscnet_forward.9} parent=47 // pred_check_branch
        %645 = sbr.rel (%p643) target = $region52
      $region51: #{dscnet_forward.9} parent=47 // pred_region
        %p646 = scmp.lt.s32.totalorder %s17, 1
        %s647 = scalar_select %p646, %s17, 1
        %s648 = smul.addr %s647, 2
        %s649 = scalar_lea.vmem %s5, %s648
      $region52: #{dscnet_forward.9} parent=47 // pred_fallthru
        _
    $region48: #{dscnet_forward.9} parent=5 // pred_fallthru
      _
  $region6: #{dscnet_forward.9} parent=0 // loop_footer
    %s15 = sadd.s32 1, %s11
  $region7: #{dscnet_forward.9} parent=0 // loop_footer_branch
    %10 = sbr.rel target = $region3
  $region8: #{dscnet_forward.9} parent=0 // loop_exit
    _

</llo_original>
